<compile_context>
chip_gen: v5e
topology: v5e:2x2
jax: 0.10.0
libtpu: 0.0.40
codegen_flags: <defaults>
</compile_context>

<pallas_src>
import functools
import math

import jax
import jax.numpy as jnp
from jax import lax
from jax.experimental import pallas as pl
from jax.experimental.pallas import tpu as pltpu


_EPS = 1e-4


def _use_bf16_exp() -> bool:
    """bf16 EUP exists on v6e/v7x; keep exp in f32 on v5e and older / unknown."""
    try:
        kind = jax.devices()[0].device_kind.lower()
    except Exception:
        return False
    return not any(tag in kind for tag in ("v2", "v3", "v4", "v5"))


# ----------------------------------------------------------------------------
# k-pass: accumulate ctx_ext = v_ext @ p^T  of shape (D_pad, M), where
#   rows 0..D-1 hold  sum_n v_n k'_n^T   and row D holds  sum_n k'_n  (k_sum),
# with flash-style online rescaling of the per-(batch,head) global k_dash max.
# ----------------------------------------------------------------------------
def _favor_kpass_kernel(kT_ref, vT_ref, projT_ref, ctx_ref, m_sc, sv_sc, *,
                        n_total, eps, diag_scale, bf16_exp):
    t = pl.program_id(1)
    nt = pl.num_programs(1)

    @pl.when(t == 0)
    def _init():
        ctx_ref[...] = jnp.zeros_like(ctx_ref)
        m_sc[...] = jnp.full_like(m_sc, -jnp.inf)
        sv_sc[...] = jnp.zeros_like(sv_sc)

    kT = kT_ref[...]                                   # (D, TN)     bf16
    vT = vT_ref[...]                                   # (D_pad, TN) bf16 (ones-row at D)
    projT = projT_ref[...]                             # (M, D)      bf16 (pre-scaled)
    tn = kT.shape[1]

    k32 = kT.astype(jnp.float32)
    # (M, TN) = (data_normalizer*proj) @ k^T
    k_dash = jnp.dot(projT, kT, preferred_element_type=jnp.float32)
    k_diag = jnp.sum(k32 * k32, axis=0, keepdims=True) * diag_scale   # (1, TN)

    if n_total % tn != 0:
        # Partial last tile: mask garbage columns out of max / accumulations.
        col = t * tn + lax.broadcasted_iota(jnp.int32, (1, tn), 1)
        valid = col < n_total                                          # (1, TN)
        k_dash_m = jnp.where(valid, k_dash, -jnp.inf)
        vT = jnp.where(valid, vT, jnp.zeros_like(vT))
    else:
        valid = None
        k_dash_m = k_dash

    # Online global max over k_dash (reference: torch.amax over (N, M)).
    m_prev = m_sc[...]                                 # (1, 1)
    m_new = jnp.maximum(m_prev, jnp.max(k_dash_m))     # (1, 1)
    scale = jnp.exp(m_prev - m_new)                    # rescale of old accumulator

    expo = k_dash - k_diag - m_new                     # (M, TN), <= 0
    if bf16_exp:
        p = jnp.exp(expo.astype(jnp.bfloat16))         # bf16 EUP (v6e/v7x)
    else:
        p = jnp.exp(expo).astype(jnp.bfloat16)
    if valid is not None:
        p = jnp.where(valid, p, jnp.zeros_like(p))

    # ctx_ext (D_pad, M) += v_ext (D_pad, TN) @ p^T (TN, M)   [f32 accumulate]
    ctx_ref[...] = ctx_ref[...] * scale + lax.dot_general(
        vT, p, (((1,), (1,)), ((), ())), preferred_element_type=jnp.float32)
    # sum_n v_ext (no max rescale: used for the "+eps after exp" correction;
    # its ones-row also counts the number of valid positions N).
    sv_sc[...] = sv_sc[...] + jnp.sum(vT.astype(jnp.float32), axis=1, keepdims=True)
    m_sc[...] = m_new

    @pl.when(t == nt - 1)
    def _finalize():
        # k' = exp(...) + eps  =>  ctx_ext += eps * sum_n v_ext   (exact).
        # ratio = M**-0.5 cancels between numerator and denominator: dropped.
        ctx_ref[...] = ctx_ref[...] + eps * sv_sc[...]


# ----------------------------------------------------------------------------
# q-pass: q' = exp(q_dash - q_diag - colmax) + eps  (per-query max over M)
#         out_ext = ctx_ext @ q'   -> rows 0..D-1 numerator, row D denominator
#         out = num / denom   (lane-dense (D, TN) store)
# ----------------------------------------------------------------------------
def _favor_qpass_kernel(qT_ref, projT_ref, ctx_ref, oT_ref, *,
                        eps, diag_scale, bf16_exp):
    qT = qT_ref[...]                                   # (D, TN)  bf16
    projT = projT_ref[...]                             # (M, D)   bf16
    q32 = qT.astype(jnp.float32)

    q_dash = jnp.dot(projT, qT, preferred_element_type=jnp.float32)   # (M, TN)
    q_diag = jnp.sum(q32 * q32, axis=0, keepdims=True) * diag_scale   # (1, TN)
    expo = q_dash - q_diag - jnp.max(q_dash, axis=0, keepdims=True)   # (M, TN)
    if bf16_exp:
        q_prime = jnp.exp(expo.astype(jnp.bfloat16)) + eps            # bf16
    else:
        q_prime = (jnp.exp(expo) + eps).astype(jnp.bfloat16)

    # bf16 operands on the MXU, f32 accumulation (review: only f32 matmul left).
    ctx = ctx_ref[...].astype(jnp.bfloat16)            # (D_pad, M)
    out_ext = jnp.dot(ctx, q_prime, preferred_element_type=jnp.float32)  # (D_pad, TN)

    d = oT_ref.shape[0]
    num = out_ext[:d, :]                               # (D, TN)
    denom = out_ext[d:d + 1, :]                        # (1, TN) fused denominator
    oT_ref[...] = (num * pl.reciprocal(denom, approx=True)).astype(oT_ref.dtype)


# ----------------------------------------------------------------------------
# Wrapper around the two pallas_calls
# ----------------------------------------------------------------------------
def favor_attention(qT, kT, vT_ext, projT, *, seq_tile=2048, bf16_exp=False):
    """FAVOR+ attention core.

    qT, kT  : (B*H, D, N)     bf16 (transposed head layout)
    vT_ext  : (B*H, D_pad, N) bf16, rows [0:D]=v^T, row D = ones, rest zeros
    projT   : (M, D)          bf16, data_normalizer pre-folded
    returns : (B*H, D, N)     bf16 attention output (transposed)

    seq_tile should be a multiple of 128 (used only when N > seq_tile).
    """
    BH, D, N = qT.shape
    D_pad = vT_ext.shape[1]
    M = projT.shape[0]

    TN = N if N <= seq_tile else seq_tile
    NT = pl.cdiv(N, TN)

    diag_scale = 0.5 * float(D) ** -0.5                # 0.5 * data_normalizer**2

    # Footprint-derived VMEM limit (double-buffered ins/outs + f32 temporaries),
    # capped below v7x's 64 MiB physical VMEM.
    bf, f4 = 2, 4
    io = 2 * TN * bf * (2 * D + D_pad) + 2 * (M * D * bf + D_pad * M * f4)
    tmp = TN * (3 * M * f4 + M * bf + D_pad * f4 + 2 * D * f4)
    vmem_limit = int(min(max(2 * (io + tmp) + (4 << 20), 16 << 20), 56 << 20))

    seq_spec = pl.BlockSpec((None, D, TN), lambda i, t: (i, 0, t))
    vext_spec = pl.BlockSpec((None, D_pad, TN), lambda i, t: (i, 0, t))
    proj_spec = pl.BlockSpec((M, D), lambda i, t: (0, 0))
    ctx_spec = pl.BlockSpec((None, D_pad, M), lambda i, t: (i, 0, 0))

    kpass = functools.partial(_favor_kpass_kernel, n_total=N, eps=_EPS,
                              diag_scale=diag_scale, bf16_exp=bf16_exp)
    qpass = functools.partial(_favor_qpass_kernel, eps=_EPS,
                              diag_scale=diag_scale, bf16_exp=bf16_exp)

    # ---- k-pass: sequence reduction into the VMEM-resident fused context ----
    # TODO(synk): when B*H < 2 on v7x, split the k-pass reduction across the two
    # TensorCores (two partial ctx accumulators + a tiny combine) so one core
    # does not idle; with the typical B*H >= 2 the "parallel" axis covers it.
    ctx = pl.pallas_call(
        kpass,
        out_shape=jax.ShapeDtypeStruct((BH, D_pad, M), jnp.float32),
        grid_spec=pltpu.PrefetchScalarGridSpec(
            num_scalar_prefetch=0,
            grid=(BH, NT),
            in_specs=[seq_spec, vext_spec, proj_spec],
            out_specs=ctx_spec,
            scratch_shapes=[pltpu.VMEM((1, 1), jnp.float32),       # running global max
                            pltpu.VMEM((D_pad, 1), jnp.float32)],  # sum_n v_ext
        ),
        compiler_params=pltpu.CompilerParams(
            dimension_semantics=("parallel", "arbitrary"),
            vmem_limit_bytes=vmem_limit),
    )(kT, vT_ext, projT)

    # ---- q-pass: stream q tiles, write lane-dense (D, TN) output tiles ----
    out = pl.pallas_call(
        qpass,
        out_shape=jax.ShapeDtypeStruct((BH, D, N), jnp.bfloat16),
        grid_spec=pltpu.PrefetchScalarGridSpec(
            num_scalar_prefetch=0,
            grid=(BH, NT),
            in_specs=[seq_spec, proj_spec, ctx_spec],
            out_specs=seq_spec,
        ),
        compiler_params=pltpu.CompilerParams(
            dimension_semantics=("parallel", "parallel"),
            vmem_limit_bytes=vmem_limit),
    )(qT, projT, ctx)

    return out


# ----------------------------------------------------------------------------
# Parameter setup (deterministic), mirroring performer_pytorch.SelfAttention
# ----------------------------------------------------------------------------
def gaussian_orthogonal_random_matrix(key, nb_rows, nb_columns):
    """scaling=0 variant from performer_pytorch."""
    nb_full_blocks = nb_rows // nb_columns
    keys = jax.random.split(key, nb_full_blocks + 2)
    blocks = []
    for i in range(nb_full_blocks):
        g = jax.random.normal(keys[i], (nb_columns, nb_columns), dtype=jnp.float32)
        qm, _ = jnp.linalg.qr(g)
        blocks.append(qm.T)
    remaining = nb_rows - nb_full_blocks * nb_columns
    if remaining > 0:
        g = jax.random.normal(keys[-2], (nb_columns, nb_columns), dtype=jnp.float32)
        qm, _ = jnp.linalg.qr(g)
        blocks.append(qm.T[:remaining])
    mat = jnp.concatenate(blocks, axis=0)
    multiplier = jnp.linalg.norm(
        jax.random.normal(keys[-1], (nb_rows, nb_columns), dtype=jnp.float32), axis=1)
    return multiplier[:, None] * mat


def _padded_nb_features(dim_head):
    # Reference default: int(dim_head * log(dim_head)).  CEIL-rounded to a
    # multiple of 128 for lane-dense (M, *) tiles (never below the reference).
    raw = int(dim_head * math.log(dim_head))
    return max(128, int(math.ceil(raw / 128.0)) * 128)


def init_params(key, d_hidden, n_heads):
    dim_head = d_hidden // n_heads
    inner_dim = dim_head * n_heads
    nb_features = _padded_nb_features(dim_head)

    ks = jax.random.split(key, 9)
    bound_in = 1.0 / math.sqrt(d_hidden)
    bound_out = 1.0 / math.sqrt(inner_dim)

    def lin(kw, kb, fan_in, fan_out, bound):
        w = jax.random.uniform(kw, (fan_in, fan_out), minval=-bound, maxval=bound,
                               dtype=jnp.float32)
        b = jax.random.uniform(kb, (fan_out,), minval=-bound, maxval=bound,
                               dtype=jnp.float32)
        return w, b

    w_q, b_q = lin(ks[0], ks[1], d_hidden, inner_dim, bound_in)
    w_k, b_k = lin(ks[2], ks[3], d_hidden, inner_dim, bound_in)
    w_v, b_v = lin(ks[4], ks[5], d_hidden, inner_dim, bound_in)
    w_o, b_o = lin(ks[6], ks[7], inner_dim, d_hidden, bound_out)
    proj = gaussian_orthogonal_random_matrix(ks[8], nb_features, dim_head)  # (M, D)

    return dict(w_q=w_q, b_q=b_q, w_k=w_k, b_k=b_k, w_v=w_v, b_v=b_v,
                w_o=w_o, b_o=b_o, proj=proj,
                n_heads=n_heads, dim_head=dim_head)


# ----------------------------------------------------------------------------
# Full forward pass (glue in plain JAX, attention core in Pallas)
# ----------------------------------------------------------------------------
@functools.partial(jax.jit,
                   static_argnames=("n_heads", "dim_head", "seq_tile", "bf16_exp"))
def favorplus_forward(x, w_q, b_q, w_k, b_k, w_v, b_v, w_o, b_o, proj,
                      *, n_heads, dim_head, seq_tile=2048, bf16_exp=False):
    B, N, _ = x.shape
    H, Dh = n_heads, dim_head
    D_pad = ((Dh + 1 + 7) // 8) * 8        # room for the appended ones-row

    # QKV projections emitted directly in the transposed (B, H, Dh, N) head
    # layout; XLA fuses the layout change into the projection / bf16 convert,
    # so no separate transpose pass over HBM feeds the Pallas kernels.
    def qkv_T(w, b):
        t = jnp.einsum("bnc,che->bhen", x, w.reshape(-1, H, Dh))
        t = t + b.reshape(H, Dh, 1)
        return t.astype(jnp.bfloat16)

    qT = qkv_T(w_q, b_q).reshape(B * H, Dh, N)
    kT = qkv_T(w_k, b_k).reshape(B * H, Dh, N)
    vT = qkv_T(w_v, b_v)                                           # (B, H, Dh, N)

    # Append a ones-row (plus zero padding to a multiple of 8 sublanes) so the
    # context matmul also produces k_sum and the q-pass matmul also produces
    # the attention denominator (fused denominator).
    ones = jnp.ones((B, H, 1, N), jnp.bfloat16)
    zpad = jnp.zeros((B, H, D_pad - Dh - 1, N), jnp.bfloat16)
    vT_ext = jnp.concatenate([vT, ones, zpad], axis=2).reshape(B * H, D_pad, N)

    # Fold data_normalizer into the projection: (c*x) @ P^T == (c*P) @ x^T.
    data_normalizer = float(Dh) ** -0.25
    projT = (proj * data_normalizer).astype(jnp.bfloat16)          # (M, Dh)

    outT = favor_attention(qT, kT, vT_ext, projT,
                           seq_tile=seq_tile, bf16_exp=bf16_exp)   # (B*H, Dh, N)

    # Output projection consumes the transposed layout directly (no transpose
    # pass): out[b,n,:] = sum_{h,e} attn[b,h,e,n] * W_o[h*Dh+e, :] + b_o.
    outT = outT.reshape(B, H, Dh, N).astype(jnp.float32)
    out = jnp.einsum("bhen,heo->bno", outT, w_o.reshape(H, Dh, -1)) + b_o
    # dropout is identity at inference
    return out


if __name__ == "__main__":
    d_hidden = 32
    n_heads = 4
    B, N = 2, 16

    key = jax.random.PRNGKey(0)
    k_param, k_x = jax.random.split(key)
    params = init_params(k_param, d_hidden, n_heads)

    x = jax.random.normal(k_x, (B, N, d_hidden), dtype=jnp.float32)

    out = favorplus_forward(
        x,
        params["w_q"], params["b_q"],
        params["w_k"], params["b_k"],
        params["w_v"], params["b_v"],
        params["w_o"], params["b_o"],
        params["proj"],
        n_heads=params["n_heads"], dim_head=params["dim_head"],
        bf16_exp=_use_bf16_exp(),
    )
    jax.block_until_ready(out)
    assert out.shape == (B, N, d_hidden)
    assert bool(jnp.all(jnp.isfinite(out)))
    print("KERNEL_OK")
</pallas_src>

<mosaic_0001>
module attributes {stable_mosaic.version = 11 : i64} {
  func.func @_favor_qpass_kernel(%arg0: i32, %arg1: i32, %arg2: memref<1x8x16xbf16, #tpu.memory_space<vmem>>, %arg3: memref<128x8xbf16, #tpu.memory_space<vmem>>, %arg4: memref<1x16x128xf32, #tpu.memory_space<vmem>>, %arg5: memref<1x8x16xbf16, #tpu.memory_space<vmem>>) attributes {dimension_semantics = [#tpu.dimension_semantics<parallel>, #tpu.dimension_semantics<parallel>], iteration_bounds = array<i64: 8, 1>, scalar_prefetch = 0 : i64, scratch_operands = 0 : i64, tpu.core_type = #tpu.core_type<tc>, window_params = [{transform_indices = @transform_0, window_bounds = array<i64: 1, 8, 16>}, {pipeline_mode = #tpu.pipeline_mode<synchronous>, transform_indices = @transform_1, window_bounds = array<i64: 128, 8>}, {transform_indices = @transform_2, window_bounds = array<i64: 1, 16, 128>}, {transform_indices = @transform_3, window_bounds = array<i64: 1, 8, 16>}]} {
    %c0 = arith.constant 0 : index
    %c0_0 = arith.constant 0 : index
    %c0_1 = arith.constant 0 : index
    %0 = vector.load %arg2[%c0, %c0_0, %c0_1] : memref<1x8x16xbf16, #tpu.memory_space<vmem>>, vector<1x8x16xbf16>
    %1 = vector.shape_cast %0 : vector<1x8x16xbf16> to vector<8x16xbf16>
    %c0_2 = arith.constant 0 : index
    %c0_3 = arith.constant 0 : index
    %2 = vector.load %arg3[%c0_2, %c0_3] : memref<128x8xbf16, #tpu.memory_space<vmem>>, vector<128x8xbf16>
    %3 = arith.extf %1 : vector<8x16xbf16> to vector<8x16xf32>
    %cst = arith.constant dense<0.000000e+00> : vector<128x16xf32>
    %4 = tpu.matmul %2, %1, %cst {dimension_numbers = #tpu.dot_dimension_numbers<[1], [0], [0], [1], [0, 0, 1, 1], [], []>} : vector<128x8xbf16>, vector<8x16xbf16>, vector<128x16xf32> -> vector<128x16xf32>
    %5 = arith.mulf %3, %3 : vector<8x16xf32>
    %cst_4 = arith.constant dense<0.000000e+00> : vector<16xf32>
    %6 = vector.multi_reduction <add>, %5, %cst_4 [0] : vector<8x16xf32> to vector<16xf32>
    %7 = vector.shape_cast %6 : vector<16xf32> to vector<1x16xf32>
    %cst_5 = arith.constant 0.176776692 : f32
    %8 = vector.broadcast %cst_5 : f32 to vector<1x16xf32>
    %9 = arith.mulf %7, %8 : vector<1x16xf32>
    %10 = vector.broadcast %9 : vector<1x16xf32> to vector<128x16xf32>
    %11 = arith.subf %4, %10 : vector<128x16xf32>
    %cst_6 = arith.constant dense<0xFF800000> : vector<16xf32>
    %12 = vector.multi_reduction <maximumf>, %4, %cst_6 [0] : vector<128x16xf32> to vector<16xf32>
    %13 = vector.shape_cast %12 : vector<16xf32> to vector<1x16xf32>
    %14 = vector.broadcast %13 : vector<1x16xf32> to vector<128x16xf32>
    %15 = arith.subf %11, %14 : vector<128x16xf32>
    %16 = arith.truncf %15 : vector<128x16xf32> to vector<128x16xbf16>
    %17 = math.exp %16 : vector<128x16xbf16>
    %cst_7 = arith.constant 1.001360e-04 : bf16
    %18 = vector.broadcast %cst_7 : bf16 to vector<128x16xbf16>
    %19 = arith.addf %17, %18 : vector<128x16xbf16>
    %c0_8 = arith.constant 0 : index
    %c0_9 = arith.constant 0 : index
    %c0_10 = arith.constant 0 : index
    %20 = vector.load %arg4[%c0_8, %c0_9, %c0_10] : memref<1x16x128xf32, #tpu.memory_space<vmem>>, vector<1x16x128xf32>
    %21 = vector.shape_cast %20 : vector<1x16x128xf32> to vector<16x128xf32>
    %22 = arith.truncf %21 : vector<16x128xf32> to vector<16x128xbf16>
    %cst_11 = arith.constant dense<0.000000e+00> : vector<16x16xf32>
    %23 = tpu.matmul %22, %19, %cst_11 {dimension_numbers = #tpu.dot_dimension_numbers<[1], [0], [0], [1], [0, 0, 1, 1], [], []>} : vector<16x128xbf16>, vector<128x16xbf16>, vector<16x16xf32> -> vector<16x16xf32>
    %24 = vector.extract_strided_slice %23 {offsets = [0, 0], sizes = [8, 16], strides = [1, 1]} : vector<16x16xf32> to vector<8x16xf32>
    %25 = vector.extract_strided_slice %23 {offsets = [8, 0], sizes = [1, 16], strides = [1, 1]} : vector<16x16xf32> to vector<1x16xf32>
    %26 = tpu.reciprocal %25 {approx = true} : vector<1x16xf32> -> vector<1x16xf32>
    %27 = vector.broadcast %26 : vector<1x16xf32> to vector<8x16xf32>
    %28 = arith.mulf %24, %27 : vector<8x16xf32>
    %29 = arith.truncf %28 : vector<8x16xf32> to vector<8x16xbf16>
    %c0_12 = arith.constant 0 : index
    %c0_13 = arith.constant 0 : index
    %c0_14 = arith.constant 0 : index
    %30 = vector.load %arg5[%c0_12, %c0_13, %c0_14] : memref<1x8x16xbf16, #tpu.memory_space<vmem>>, vector<1x8x16xbf16>
    %31 = vector.shape_cast %30 : vector<1x8x16xbf16> to vector<8x16xbf16>
    %32 = vector.shape_cast %29 : vector<8x16xbf16> to vector<1x8x16xbf16>
    tpu.vector_store %arg5[%c0_12, %c0_13, %c0_14], %32 {strides = array<i32>} : memref<1x8x16xbf16, #tpu.memory_space<vmem>>, vector<1x8x16xbf16>,
    return
  }
  func.func @transform_0(%arg0: i32, %arg1: i32) -> (i32, i32, i32) {
    %c0_i32 = arith.constant 0 : i32
    %c0_i32_0 = arith.constant 0 : i32
    return %arg0, %c0_i32, %arg1 : i32, i32, i32
  }
  func.func @transform_1(%arg0: i32, %arg1: i32) -> (i32, i32) {
    %c0_i32 = arith.constant 0 : i32
    %c0_i32_0 = arith.constant 0 : i32
    %c0_i32_1 = arith.constant 0 : i32
    return %c0_i32, %c0_i32_0 : i32, i32
  }
  func.func @transform_2(%arg0: i32, %arg1: i32) -> (i32, i32, i32) {
    %c0_i32 = arith.constant 0 : i32
    %c0_i32_0 = arith.constant 0 : i32
    %c0_i32_1 = arith.constant 0 : i32
    return %arg0, %c0_i32, %c0_i32_0 : i32, i32, i32
  }
  func.func @transform_3(%arg0: i32, %arg1: i32) -> (i32, i32, i32) {
    %c0_i32 = arith.constant 0 : i32
    %c0_i32_0 = arith.constant 0 : i32
    return %arg0, %c0_i32, %arg1 : i32, i32, i32
  }
}

module attributes {stable_mosaic.version = 11 : i64} {
  func.func @_favor_kpass_kernel(%arg0: i32, %arg1: i32, %arg2: memref<1x8x16xbf16, #tpu.memory_space<vmem>>, %arg3: memref<1x16x16xbf16, #tpu.memory_space<vmem>>, %arg4: memref<128x8xbf16, #tpu.memory_space<vmem>>, %arg5: memref<1x16x128xf32, #tpu.memory_space<vmem>>, %arg6: memref<1x1xf32, #tpu.memory_space<vmem>>, %arg7: memref<16x1xf32, #tpu.memory_space<vmem>>) attributes {dimension_semantics = [#tpu.dimension_semantics<parallel>, #tpu.dimension_semantics<arbitrary>], iteration_bounds = array<i64: 8, 1>, scalar_prefetch = 0 : i64, scratch_operands = 2 : i64, tpu.core_type = #tpu.core_type<tc>, window_params = [{transform_indices = @transform_0, window_bounds = array<i64: 1, 8, 16>}, {transform_indices = @transform_1, window_bounds = array<i64: 1, 16, 16>}, {pipeline_mode = #tpu.pipeline_mode<synchronous>, transform_indices = @transform_2, window_bounds = array<i64: 128, 8>}, {transform_indices = @transform_3, window_bounds = array<i64: 1, 16, 128>}]} {
    %c0_i32 = arith.constant 0 : i32
    %0 = arith.cmpi eq, %arg1, %c0_i32 : i32
    %1 = arith.extui %0 : i1 to i32
    %c0_i32_0 = arith.constant 0 : i32
    %2 = arith.cmpi ne, %1, %c0_i32_0 : i32
    scf.if %2 {
      %cst_29 = arith.constant 0.000000e+00 : f32
      %49 = vector.broadcast %cst_29 : f32 to vector<16x128xf32>
      %c0_30 = arith.constant 0 : index
      %c0_31 = arith.constant 0 : index
      %c0_32 = arith.constant 0 : index
      %50 = vector.load %arg5[%c0_30, %c0_31, %c0_32] : memref<1x16x128xf32, #tpu.memory_space<vmem>>, vector<1x16x128xf32>
      %51 = vector.shape_cast %50 : vector<1x16x128xf32> to vector<16x128xf32>
      %52 = vector.shape_cast %49 : vector<16x128xf32> to vector<1x16x128xf32>
      tpu.vector_store %arg5[%c0_30, %c0_31, %c0_32], %52 {strides = array<i32>} : memref<1x16x128xf32, #tpu.memory_space<vmem>>, vector<1x16x128xf32>,
      %cst_33 = arith.constant 0xFF800000 : f32
      %53 = vector.broadcast %cst_33 : f32 to vector<1x1xf32>
      %c0_34 = arith.constant 0 : index
      %c0_35 = arith.constant 0 : index
      %54 = vector.load %arg6[%c0_34, %c0_35] : memref<1x1xf32, #tpu.memory_space<vmem>>, vector<1x1xf32>
      tpu.vector_store %arg6[%c0_34, %c0_35], %53 {strides = array<i32>} : memref<1x1xf32, #tpu.memory_space<vmem>>, vector<1x1xf32>,
      %cst_36 = arith.constant 0.000000e+00 : f32
      %55 = vector.broadcast %cst_36 : f32 to vector<16x1xf32>
      %c0_37 = arith.constant 0 : index
      %c0_38 = arith.constant 0 : index
      %56 = vector.load %arg7[%c0_37, %c0_38] : memref<16x1xf32, #tpu.memory_space<vmem>>, vector<16x1xf32>
      tpu.vector_store %arg7[%c0_37, %c0_38], %55 {strides = array<i32>} : memref<16x1xf32, #tpu.memory_space<vmem>>, vector<16x1xf32>,
    } else {
    }
    %c0 = arith.constant 0 : index
    %c0_1 = arith.constant 0 : index
    %c0_2 = arith.constant 0 : index
    %3 = vector.load %arg2[%c0, %c0_1, %c0_2] : memref<1x8x16xbf16, #tpu.memory_space<vmem>>, vector<1x8x16xbf16>
    %4 = vector.shape_cast %3 : vector<1x8x16xbf16> to vector<8x16xbf16>
    %c0_3 = arith.constant 0 : index
    %c0_4 = arith.constant 0 : index
    %c0_5 = arith.constant 0 : index
    %5 = vector.load %arg3[%c0_3, %c0_4, %c0_5] : memref<1x16x16xbf16, #tpu.memory_space<vmem>>, vector<1x16x16xbf16>
    %6 = vector.shape_cast %5 : vector<1x16x16xbf16> to vector<16x16xbf16>
    %c0_6 = arith.constant 0 : index
    %c0_7 = arith.constant 0 : index
    %7 = vector.load %arg4[%c0_6, %c0_7] : memref<128x8xbf16, #tpu.memory_space<vmem>>, vector<128x8xbf16>
    %8 = arith.extf %4 : vector<8x16xbf16> to vector<8x16xf32>
    %cst = arith.constant dense<0.000000e+00> : vector<128x16xf32>
    %9 = tpu.matmul %7, %4, %cst {dimension_numbers = #tpu.dot_dimension_numbers<[1], [0], [0], [1], [0, 0, 1, 1], [], []>} : vector<128x8xbf16>, vector<8x16xbf16>, vector<128x16xf32> -> vector<128x16xf32>
    %10 = arith.mulf %8, %8 : vector<8x16xf32>
    %cst_8 = arith.constant dense<0.000000e+00> : vector<16xf32>
    %11 = vector.multi_reduction <add>, %10, %cst_8 [0] : vector<8x16xf32> to vector<16xf32>
    %12 = vector.shape_cast %11 : vector<16xf32> to vector<1x16xf32>
    %cst_9 = arith.constant 0.176776692 : f32
    %13 = vector.broadcast %cst_9 : f32 to vector<1x16xf32>
    %14 = arith.mulf %12, %13 : vector<1x16xf32>
    %c0_10 = arith.constant 0 : index
    %c0_11 = arith.constant 0 : index
    %15 = vector.load %arg6[%c0_10, %c0_11] : memref<1x1xf32, #tpu.memory_space<vmem>>, vector<1x1xf32>
    %16 = vector.shape_cast %9 : vector<128x16xf32> to vector<1x128x16xf32>
    %cst_12 = arith.constant dense<0xFF800000> : vector<1xf32>
    %17 = vector.multi_reduction <maximumf>, %16, %cst_12 [1, 2] : vector<1x128x16xf32> to vector<1xf32>
    %18 = vector.shape_cast %17 : vector<1xf32> to vector<1x1x1xf32>
    %19 = vector.extract %18[0, 0, 0] : f32 from vector<1x1x1xf32>
    %20 = vector.broadcast %19 : f32 to vector<1x1xf32>
    %21 = arith.maximumf %15, %20 : vector<1x1xf32>
    %22 = arith.subf %15, %21 : vector<1x1xf32>
    %23 = math.exp %22 : vector<1x1xf32>
    %24 = vector.broadcast %14 : vector<1x16xf32> to vector<128x16xf32>
    %25 = arith.subf %9, %24 : vector<128x16xf32>
    %26 = vector.broadcast %21 : vector<1x1xf32> to vector<128x16xf32>
    %27 = arith.subf %25, %26 : vector<128x16xf32>
    %28 = arith.truncf %27 : vector<128x16xf32> to vector<128x16xbf16>
    %29 = math.exp %28 : vector<128x16xbf16>
    %c0_13 = arith.constant 0 : index
    %c0_14 = arith.constant 0 : index
    %c0_15 = arith.constant 0 : index
    %30 = vector.load %arg5[%c0_13, %c0_14, %c0_15] : memref<1x16x128xf32, #tpu.memory_space<vmem>>, vector<1x16x128xf32>
    %31 = vector.shape_cast %30 : vector<1x16x128xf32> to vector<16x128xf32>
    %32 = vector.broadcast %23 : vector<1x1xf32> to vector<16x128xf32>
    %33 = arith.mulf %31, %32 : vector<16x128xf32>
    %cst_16 = arith.constant dense<0.000000e+00> : vector<16x128xf32>
    %34 = tpu.matmul %6, %29, %cst_16 {dimension_numbers = #tpu.dot_dimension_numbers<[1], [1], [0], [0], [0, 0, 1, 0], [], []>} : vector<16x16xbf16>, vector<128x16xbf16>, vector<16x128xf32> -> vector<16x128xf32>
    %35 = arith.addf %33, %34 : vector<16x128xf32>
    %c0_17 = arith.constant 0 : index
    %c0_18 = arith.constant 0 : index
    %c0_19 = arith.constant 0 : index
    %36 = vector.load %arg5[%c0_17, %c0_18, %c0_19] : memref<1x16x128xf32, #tpu.memory_space<vmem>>, vector<1x16x128xf32>
    %37 = vector.shape_cast %36 : vector<1x16x128xf32> to vector<16x128xf32>
    %38 = vector.shape_cast %35 : vector<16x128xf32> to vector<1x16x128xf32>
    tpu.vector_store %arg5[%c0_17, %c0_18, %c0_19], %38 {strides = array<i32>} : memref<1x16x128xf32, #tpu.memory_space<vmem>>, vector<1x16x128xf32>,
    %c0_20 = arith.constant 0 : index
    %c0_21 = arith.constant 0 : index
    %39 = vector.load %arg7[%c0_20, %c0_21] : memref<16x1xf32, #tpu.memory_space<vmem>>, vector<16x1xf32>
    %40 = arith.extf %6 : vector<16x16xbf16> to vector<16x16xf32>
    %cst_22 = arith.constant dense<0.000000e+00> : vector<16xf32>
    %41 = vector.multi_reduction <add>, %40, %cst_22 [1] : vector<16x16xf32> to vector<16xf32>
    %42 = vector.shape_cast %41 : vector<16xf32> to vector<16x1xf32>
    %43 = arith.addf %39, %42 : vector<16x1xf32>
    %c0_23 = arith.constant 0 : index
    %c0_24 = arith.constant 0 : index
    %44 = vector.load %arg7[%c0_23, %c0_24] : memref<16x1xf32, #tpu.memory_space<vmem>>, vector<16x1xf32>
    tpu.vector_store %arg7[%c0_23, %c0_24], %43 {strides = array<i32>} : memref<16x1xf32, #tpu.memory_space<vmem>>, vector<16x1xf32>,
    %c0_25 = arith.constant 0 : index
    %c0_26 = arith.constant 0 : index
    %45 = vector.load %arg6[%c0_25, %c0_26] : memref<1x1xf32, #tpu.memory_space<vmem>>, vector<1x1xf32>
    tpu.vector_store %arg6[%c0_25, %c0_26], %21 {strides = array<i32>} : memref<1x1xf32, #tpu.memory_space<vmem>>, vector<1x1xf32>,
    %c0_i32_27 = arith.constant 0 : i32
    %46 = arith.cmpi eq, %arg1, %c0_i32_27 : i32
    %47 = arith.extui %46 : i1 to i32
    %c0_i32_28 = arith.constant 0 : i32
    %48 = arith.cmpi ne, %47, %c0_i32_28 : i32
    scf.if %48 {
      %c0_29 = arith.constant 0 : index
      %c0_30 = arith.constant 0 : index
      %c0_31 = arith.constant 0 : index
      %49 = vector.load %arg5[%c0_29, %c0_30, %c0_31] : memref<1x16x128xf32, #tpu.memory_space<vmem>>, vector<1x16x128xf32>
      %50 = vector.shape_cast %49 : vector<1x16x128xf32> to vector<16x128xf32>
      %c0_32 = arith.constant 0 : index
      %c0_33 = arith.constant 0 : index
      %51 = vector.load %arg7[%c0_32, %c0_33] : memref<16x1xf32, #tpu.memory_space<vmem>>, vector<16x1xf32>
      %cst_34 = arith.constant 9.99999974E-5 : f32
      %52 = vector.broadcast %cst_34 : f32 to vector<16x1xf32>
      %53 = arith.mulf %52, %51 : vector<16x1xf32>
      %54 = vector.broadcast %53 : vector<16x1xf32> to vector<16x128xf32>
      %55 = arith.addf %50, %54 : vector<16x128xf32>
      %c0_35 = arith.constant 0 : index
      %c0_36 = arith.constant 0 : index
      %c0_37 = arith.constant 0 : index
      %56 = vector.load %arg5[%c0_35, %c0_36, %c0_37] : memref<1x16x128xf32, #tpu.memory_space<vmem>>, vector<1x16x128xf32>
      %57 = vector.shape_cast %56 : vector<1x16x128xf32> to vector<16x128xf32>
      %58 = vector.shape_cast %55 : vector<16x128xf32> to vector<1x16x128xf32>
      tpu.vector_store %arg5[%c0_35, %c0_36, %c0_37], %58 {strides = array<i32>} : memref<1x16x128xf32, #tpu.memory_space<vmem>>, vector<1x16x128xf32>,
    } else {
    }
    return
  }
  func.func @transform_0(%arg0: i32, %arg1: i32) -> (i32, i32, i32) {
    %c0_i32 = arith.constant 0 : i32
    %c0_i32_0 = arith.constant 0 : i32
    return %arg0, %c0_i32, %arg1 : i32, i32, i32
  }
  func.func @transform_1(%arg0: i32, %arg1: i32) -> (i32, i32, i32) {
    %c0_i32 = arith.constant 0 : i32
    %c0_i32_0 = arith.constant 0 : i32
    return %arg0, %c0_i32, %arg1 : i32, i32, i32
  }
  func.func @transform_2(%arg0: i32, %arg1: i32) -> (i32, i32) {
    %c0_i32 = arith.constant 0 : i32
    %c0_i32_0 = arith.constant 0 : i32
    %c0_i32_1 = arith.constant 0 : i32
    return %c0_i32, %c0_i32_0 : i32, i32
  }
  func.func @transform_3(%arg0: i32, %arg1: i32) -> (i32, i32, i32) {
    %c0_i32 = arith.constant 0 : i32
    %c0_i32_0 = arith.constant 0 : i32
    %c0_i32_1 = arith.constant 0 : i32
    return %arg0, %c0_i32, %c0_i32_0 : i32, i32, i32
  }
}

</mosaic_0001>

<llo_original>
// kernel: favorplus_forward.2
$region0: #{favorplus_forward.2}
  #allocation0 [shape = 'u32[]', space=smem, size = 0x4, offset = 0x4, fixed_abs, tag = 'smem constant byte address 0x4 - core index']
  #allocation1 [shape = 'u32[72,128]{1,0:T(1,128)}', space=vmem, size = 0x9000, scoped, tag = 'internal scratch']
  #allocation2 [shape = 'f32[1,1]{1,0:T(1,128)}', space=vmem, size = 0x200, scoped, tag = 'scratch operand']
  #allocation3 [shape = 'f32[16,1]{1,0:T(8,128)}', space=vmem, size = 0x2000, scoped, tag = 'scratch operand']
  %s0 = inlined_call_operand.vmem [shape: bf16[8,8,16], index: 0, kind: input, shape index: {}]
  %s1 = inlined_call_operand.vmem [shape: bf16[8,16,16], index: 1, kind: input, shape index: {}]
  %s2 = inlined_call_operand.vmem [shape: bf16[128,8], index: 2, kind: input, shape index: {}]
  %s3 = inlined_call_operand.vmem [shape: f32[8,16,128], index: 3, kind: output, shape index: {}]
  %s4 = sld [smem:[#allocation0]]
  $region53: #{favorplus_forward.2} parent=0
    _
  %s6 = ssub.s32 1, %s4
  %s7 = scalar_select 0, %s6, %s4
  loop: start=0, step=1, limit=10
  $region2: #{favorplus_forward.2} parent=0 // loop_pre_header
    _
  $region3: #{favorplus_forward.2} parent=0 // loop_header
    %s9 = sphi 0, %s13
    %p10 = scmp.ge.s32.totalorder %s9, 10
    %s16 = sphi 0, %s28
    %s17 = sphi 0, %s24
    %s18 = sphi 0, %s16
    %s19 = sphi 0, %s17
    %s20 = sphi 0, %s18
    %s21 = sphi 0, %s19
    %s33 = sphi 0, %s35
    %s36 = sphi 0, %s33
    %s37 = sphi 0, %s36
    %s53 = sphi 0, %s37
    %s61 = sphi 0, %s63
    %s64 = sphi 0, %s61
    %s65 = sphi 0, %s64
    %s81 = sphi 0, %s65
    %s85 = sphi 0, %s85
    %s87 = sphi 0, %s85
    %s88 = sphi 0, %s87
    %s102 = sphi 0, %s88
    %s108 = sphi 0, %s110
    %s111 = sphi 0, %s108
    %s112 = sphi 0, %s111
    %s128 = sphi 0, %s112
  $region4: #{favorplus_forward.2} parent=0 // loop_header_branch
    %12 = sbr.rel (%p10) target = $region8
  $region5: #{favorplus_forward.2} parent=0 // loop_body
    %s14 = ssub.s32 %s9, 1
    %s15 = ssub.s32 %s9, 2
    %s22 = sadd.s32 1, %s17
    %p23 = scmp.ge.s32.totalorder %s22, 1
    %s24 = scalar_select %p23, 0, %s22
    %s25 = sadd.s32 1, %s16
    %s26 = scalar_select %p23, %s25, %s16
    %p27 = scmp.ge.s32.totalorder %s26, 8
    %s28 = scalar_select %p27, 0, %s26
    %s29 = ssub.s32 %s16, %s28
    %s30 = ssub.s32 %s17, %s24
    %s31 = sor.u32 %s29, %s30
    %p32 = scmp.eq.s32.totalorder %s31, 0
    %s34 = sadd.s32 %s33, 1
    %s35 = scalar_select %p32, %s33, %s34
    %p38 = pneg %p32
    %p39 = scmp.eq.s32.totalorder %s9, 7
    %p40 = por %p38, %p39
    %p41 = scmp.ne.s32.totalorder %s33, %s36
    %p42 = scmp.eq.s32.totalorder %s9, 0
    %p43 = por %p41, %p42
    %p44 = scmp.ne.s32.totalorder %s33, %s36
    %p45 = scmp.eq.s32.totalorder %s14, 7
    %p46 = por %p44, %p45
    %p47 = scmp.ne.s32.totalorder %s36, %s37
    %p48 = scmp.eq.s32.totalorder %s14, 0
    %p49 = por %p47, %p48
    %p50 = scmp.ne.s32.totalorder %s36, %s37
    %p51 = scmp.eq.s32.totalorder %s15, 7
    %p52 = por %p50, %p51
    %p54 = scmp.ne.s32.totalorder %s37, %s53
    %p55 = scmp.eq.s32.totalorder %s15, 0
    %p56 = por %p54, %p55
    %s57 = ssub.s32 %s16, %s28
    %s58 = ssub.s32 %s17, %s24
    %s59 = sor.u32 %s57, %s58
    %p60 = scmp.eq.s32.totalorder %s59, 0
    %s62 = sadd.s32 %s61, 1
    %s63 = scalar_select %p60, %s61, %s62
    %p66 = pneg %p60
    %p67 = scmp.eq.s32.totalorder %s9, 7
    %p68 = por %p66, %p67
    %p69 = scmp.ne.s32.totalorder %s61, %s64
    %p70 = scmp.eq.s32.totalorder %s9, 0
    %p71 = por %p69, %p70
    %p72 = scmp.ne.s32.totalorder %s61, %s64
    %p73 = scmp.eq.s32.totalorder %s14, 7
    %p74 = por %p72, %p73
    %p75 = scmp.ne.s32.totalorder %s64, %s65
    %p76 = scmp.eq.s32.totalorder %s14, 0
    %p77 = por %p75, %p76
    %p78 = scmp.ne.s32.totalorder %s64, %s65
    %p79 = scmp.eq.s32.totalorder %s15, 7
    %p80 = por %p78, %p79
    %p82 = scmp.ne.s32.totalorder %s65, %s81
    %p83 = scmp.eq.s32.totalorder %s15, 0
    %p84 = por %p82, %p83
    %s86 = sadd.s32 %s85, 1
    %p89 = scmp.eq.s32.totalorder %s9, 7
    %p90 = scmp.ne.s32.totalorder %s85, %s87
    %p91 = scmp.eq.s32.totalorder %s9, 0
    %p92 = por %p90, %p91
    %p93 = scmp.ne.s32.totalorder %s85, %s87
    %p94 = scmp.eq.s32.totalorder %s14, 7
    %p95 = por %p93, %p94
    %p96 = scmp.ne.s32.totalorder %s87, %s88
    %p97 = scmp.eq.s32.totalorder %s14, 0
    %p98 = por %p96, %p97
    %p99 = scmp.ne.s32.totalorder %s87, %s88
    %p100 = scmp.eq.s32.totalorder %s15, 7
    %p101 = por %p99, %p100
    %p103 = scmp.ne.s32.totalorder %s88, %s102
    %p104 = scmp.eq.s32.totalorder %s15, 0
    %p105 = por %p103, %p104
    %s106 = ssub.s32 %s16, %s28
    %p107 = scmp.eq.s32.totalorder %s106, 0
    %s109 = sadd.s32 %s108, 1
    %s110 = scalar_select %p107, %s108, %s109
    %p113 = pneg %p107
    %p114 = scmp.eq.s32.totalorder %s9, 7
    %p115 = por %p113, %p114
    %p116 = scmp.ne.s32.totalorder %s108, %s111
    %p117 = scmp.eq.s32.totalorder %s9, 0
    %p118 = por %p116, %p117
    %p119 = scmp.ne.s32.totalorder %s108, %s111
    %p120 = scmp.eq.s32.totalorder %s14, 7
    %p121 = por %p119, %p120
    %p122 = scmp.ne.s32.totalorder %s111, %s112
    %p123 = scmp.eq.s32.totalorder %s14, 0
    %p124 = por %p122, %p123
    %p125 = scmp.ne.s32.totalorder %s111, %s112
    %p126 = scmp.eq.s32.totalorder %s15, 7
    %p127 = por %p125, %p126
    %p129 = scmp.ne.s32.totalorder %s112, %s128
    %p130 = scmp.eq.s32.totalorder %s15, 0
    %p131 = por %p129, %p130
    %p132 = scmp.le.s32.totalorder 1, %s9
    %p133 = scmp.lt.s32.totalorder %s9, 9
    %p134 = pnand %p132, %p133
    %p135 = pneg %p134
    // Predicated region
    $region9: #{favorplus_forward.2} parent=5 // pred_check
      _
    $region10: #{favorplus_forward.2} parent=5 // pred_check_branch
      %137 = sbr.rel (%p134) target = $region12
    $region11: #{favorplus_forward.2} parent=5 // pred_region
      %s138 = ssub.s32 %s9, 1
      // Predicated region
      $region13: #{favorplus_forward.2} parent=11 // pred_check
        %p139 = pneg %p98
      $region14: #{favorplus_forward.2} parent=11 // pred_check_branch
        %141 = sbr.rel (%p139) target = $region16
      $region15: #{favorplus_forward.2} parent=11 // pred_region
        _
      $region16: #{favorplus_forward.2} parent=11 // pred_fallthru
        _
    $region12: #{favorplus_forward.2} parent=5 // pred_fallthru
      _
    %p142 = scmp.lt.s32.totalorder %s9, 8
    // Predicated region
    $region17: #{favorplus_forward.2} parent=5 // pred_check
      %p143 = pneg %p142
    $region18: #{favorplus_forward.2} parent=5 // pred_check_branch
      %145 = sbr.rel (%p143) target = $region20
    $region19: #{favorplus_forward.2} parent=5 // pred_region
      // Predicated region
      $region21: #{favorplus_forward.2} parent=19 // pred_check
        %p146 = pneg %p43
      $region22: #{favorplus_forward.2} parent=19 // pred_check_branch
        %148 = sbr.rel (%p146) target = $region24
      $region23: #{favorplus_forward.2} parent=19 // pred_region
        %p149 = scmp.lt.s32.totalorder %s16, 7
        %s150 = scalar_select %p149, %s16, 7
        %p151 = scmp.lt.s32.totalorder %s17, 0
        %s152 = scalar_select %p151, %s17, 0
        %s153 = sadd.s32 %s152, %s150
        %s154 = smul.addr %s153, 4
        %s155 = scalar_lea.vmem %s0, %s154
      $region24: #{favorplus_forward.2} parent=19 // pred_fallthru
        _
      // Predicated region
      $region25: #{favorplus_forward.2} parent=19 // pred_check
        %p156 = pneg %p71
      $region26: #{favorplus_forward.2} parent=19 // pred_check_branch
        %158 = sbr.rel (%p156) target = $region28
      $region27: #{favorplus_forward.2} parent=19 // pred_region
        %p159 = scmp.lt.s32.totalorder %s16, 7
        %s160 = scalar_select %p159, %s16, 7
        %p161 = scmp.lt.s32.totalorder %s17, 0
        %s162 = scalar_select %p161, %s17, 0
        %s163 = smul.addr %s160, 2
        %s164 = sadd.s32 %s162, %s163
        %s165 = smul.addr %s164, 4
        %s166 = scalar_lea.vmem %s1, %s165
      $region28: #{favorplus_forward.2} parent=19 // pred_fallthru
        _
    $region20: #{favorplus_forward.2} parent=5 // pred_fallthru
      _
    %p167 = scmp.le.s32.totalorder 1, %s9
    %p168 = scmp.lt.s32.totalorder %s9, 9
    %p169 = pnand %p167, %p168
    %p170 = pneg %p169
    // Predicated region
    $region29: #{favorplus_forward.2} parent=5 // pred_check
      _
    $region30: #{favorplus_forward.2} parent=5 // pred_check_branch
      %172 = sbr.rel (%p169) target = $region32
    $region31: #{favorplus_forward.2} parent=5 // pred_region
      %s173 = ssub.s32 %s9, 1
      %p174 = scmp.lt.s32.totalorder %s18, 7
      %s175 = scalar_select %p174, %s18, 7
      %p176 = scmp.lt.s32.totalorder %s19, 0
      %s177 = scalar_select %p176, %s19, 0
      %s178 = sadd.s32 %s177, %s175
      %s179 = smul.addr %s178, 4
      %s180 = scalar_lea.vmem %s0, %s179
      %p181 = pneg %p49
      %p182 = pneg %p46
      %p183 = scmp.lt.s32.totalorder %s18, 7
      %s184 = scalar_select %p183, %s18, 7
      %p185 = scmp.lt.s32.totalorder %s19, 0
      %s186 = scalar_select %p185, %s19, 0
      %s187 = smul.addr %s184, 2
      %s188 = sadd.s32 %s186, %s187
      %s189 = smul.addr %s188, 4
      %s190 = scalar_lea.vmem %s1, %s189
      %p191 = pneg %p77
      %p192 = pneg %p74
      %p193 = pneg %p98
      %p194 = pneg %p95
      %p195 = pneg %p124
      %p196 = pneg %p121
      %p197 = scmp.lt.s32.totalorder %s18, 7
      %s198 = scalar_select %p197, %s18, 7
      %s199 = smul.addr %s198, 2
      %s200 = smul.addr %s199, 8
      %s201 = scalar_lea.vmem %s3, %s200
      %p202 = scmp.lt.s32.totalorder %s18, 7
      %s203 = scalar_select %p202, %s18, 7
      %p204 = scmp.lt.s32.totalorder %s19, 0
      %s205 = scalar_select %p204, %s19, 0
      %s206 = sadd.s32 %s205, %s203
      %s207 = smul.addr %s206, 4
      %s208 = scalar_lea.vmem %s0, %s207
      %p209 = scmp.lt.s32.totalorder %s18, 7
      %s210 = scalar_select %p209, %s18, 7
      %p211 = scmp.lt.s32.totalorder %s19, 0
      %s212 = scalar_select %p211, %s19, 0
      %s213 = smul.addr %s210, 2
      %s214 = sadd.s32 %s212, %s213
      %s215 = smul.addr %s214, 4
      %s216 = scalar_lea.vmem %s1, %s215
      %p217 = scmp.lt.s32.totalorder %s18, 7
      %s218 = scalar_select %p217, %s18, 7
      %s219 = smul.addr %s218, 2
      %s220 = smul.addr %s219, 8
      %s221 = scalar_lea.vmem %s3, %s220
      %p223 = scmp.eq.s32.totalorder %s19, 0
      // Predicated region
      $region33: #{favorplus_forward.2} parent=31 // pred_check
        %p224 = pneg %p223
      $region34: #{favorplus_forward.2} parent=31 // pred_check_branch
        %226 = sbr.rel (%p224) target = $region36
      $region35: #{favorplus_forward.2} parent=31 // pred_region
        %227 = vst [vmem:[%s221] sm:$0xff] 0.0
        %228 = vst [vmem:[%s221 + $0x8] sm:$0xff] 0.0
        %vm229 = vcmask 0
        %230 = vst.msk [vmem:[#allocation2] sm:$0x1] %vm229, -inf
        %vm231 = vcmask 7168
        %232 = vst.msk [vmem:[#allocation3] sm:$0xff] %vm231, 0.0
        %233 = vst.msk [vmem:[#allocation3 + $0x8] sm:$0xff] %vm231, 0.0
      $region36: #{favorplus_forward.2} parent=31 // pred_fallthru
        _
      %v234 = vld [vmem:[%s208] sm:$0xf]
      %v235 = vld [vmem:[%s216] sm:$0xf]
      %v236 = vld [vmem:[%s216 + $0x4] sm:$0xf]
      %v237 = vld [vmem:[%s2] sm:$0xf]
      %v238 = vld [vmem:[%s2 + $0x4] sm:$0xf]
      %v239 = vld [vmem:[%s2 + $0x8] sm:$0xf]
      %v240 = vld [vmem:[%s2 + $0xc] sm:$0xf]
      %v241 = vld [vmem:[%s2 + $0x10] sm:$0xf]
      %v242 = vld [vmem:[%s2 + $0x14] sm:$0xf]
      %v243 = vld [vmem:[%s2 + $0x18] sm:$0xf]
      %v244 = vld [vmem:[%s2 + $0x1c] sm:$0xf]
      %v245 = vld [vmem:[%s2 + $0x20] sm:$0xf]
      %v246 = vld [vmem:[%s2 + $0x24] sm:$0xf]
      %v247 = vld [vmem:[%s2 + $0x28] sm:$0xf]
      %v248 = vld [vmem:[%s2 + $0x2c] sm:$0xf]
      %v249 = vld [vmem:[%s2 + $0x30] sm:$0xf]
      %v250 = vld [vmem:[%s2 + $0x34] sm:$0xf]
      %v251 = vld [vmem:[%s2 + $0x38] sm:$0xf]
      %v252 = vld [vmem:[%s2 + $0x3c] sm:$0xf]
      %v253 = vunpack.c.l.bf16 %v234
      %v270 = vunpack.c.l.b16 %v237
      %v271 = vunpack.c.l.b16 %v238
      %v272 = vunpack.c.l.b16 %v239
      %v273 = vunpack.c.l.b16 %v240
      %v274 = vunpack.c.l.b16 %v241
      %v275 = vunpack.c.l.b16 %v242
      %v276 = vunpack.c.l.b16 %v243
      %v277 = vunpack.c.l.b16 %v244
      %v278 = vunpack.c.l.b16 %v245
      %v279 = vunpack.c.l.b16 %v246
      %v280 = vunpack.c.l.b16 %v247
      %v281 = vunpack.c.l.b16 %v248
      %v282 = vunpack.c.l.b16 %v249
      %v283 = vunpack.c.l.b16 %v250
      %v284 = vunpack.c.l.b16 %v251
      %v285 = vunpack.c.l.b16 %v252
      %v286 = vpack.c.b16 %v271, %v270
      %v287 = vpack.c.b16 %v273, %v272
      %v288 = vpack.c.b16 %v275, %v274
      %v289 = vpack.c.b16 %v277, %v276
      %v290 = vpack.c.b16 %v279, %v278
      %v291 = vpack.c.b16 %v281, %v280
      %v292 = vpack.c.b16 %v283, %v282
      %v293 = vpack.c.b16 %v285, %v284
      %vm294 = vcmask 64512
      %v296 = vsel %vm294, %v286, 0
      %v299 = vsel %vm294, %v287, 0
      %v302 = vsel %vm294, %v288, 0
      %v305 = vsel %vm294, %v289, 0
      %v308 = vsel %vm294, %v290, 0
      %v311 = vsel %vm294, %v291, 0
      %v314 = vsel %vm294, %v292, 0
      %v317 = vsel %vm294, %v293, 0
      %vm319 = vcmask 1043456
      %v321 = vsel %vm319, %v234, 0
      %323 = vmatpush.bf16.msra.mxu0 0
      %324 = vmatpush.bf16.msra.mxu0 0
      %325 = vmatpush.bf16.msra.mxu0 0
      %326 = vmatpush.bf16.msra.mxu0 0
      %327 = vmatpush.bf16.msra.mxu0 0
      %328 = vmatpush.bf16.msra.mxu0 0
      %329 = vmatpush.bf16.msra.mxu0 0
      %330 = vmatpush.bf16.msra.mxu0 %v321
      %331 = vmatmul.bf16.gmra.mxu0 %v296
      %v332 = vpop.f32.mrf.mxu0
      %v333 = vadd.f32 0.0, %v332
      %v334 = vpop.f32.mrf.mxu0
      %v335 = vadd.f32 0.0, %v334
      %336 = vmatmul.bf16.gmra.mxu0 %v299
      %v337 = vpop.f32.mrf.mxu0
      %v338 = vadd.f32 0.0, %v337
      %v339 = vpop.f32.mrf.mxu0
      %v340 = vadd.f32 0.0, %v339
      %341 = vmatmul.bf16.gmra.mxu0 %v302
      %v342 = vpop.f32.mrf.mxu0
      %v343 = vadd.f32 0.0, %v342
      %v344 = vpop.f32.mrf.mxu0
      %v345 = vadd.f32 0.0, %v344
      %346 = vmatmul.bf16.gmra.mxu0 %v305
      %v347 = vpop.f32.mrf.mxu0
      %v348 = vadd.f32 0.0, %v347
      %v349 = vpop.f32.mrf.mxu0
      %v350 = vadd.f32 0.0, %v349
      %351 = vmatmul.bf16.gmra.mxu0 %v308
      %v352 = vpop.f32.mrf.mxu0
      %v353 = vadd.f32 0.0, %v352
      %v354 = vpop.f32.mrf.mxu0
      %v355 = vadd.f32 0.0, %v354
      %356 = vmatmul.bf16.gmra.mxu0 %v311
      %v357 = vpop.f32.mrf.mxu0
      %v358 = vadd.f32 0.0, %v357
      %v359 = vpop.f32.mrf.mxu0
      %v360 = vadd.f32 0.0, %v359
      %361 = vmatmul.bf16.gmra.mxu0 %v314
      %v362 = vpop.f32.mrf.mxu0
      %v363 = vadd.f32 0.0, %v362
      %v364 = vpop.f32.mrf.mxu0
      %v365 = vadd.f32 0.0, %v364
      %366 = vmatmul.bf16.gmra.mxu0 %v317
      %v367 = vpop.f32.mrf.mxu0
      %v368 = vadd.f32 0.0, %v367
      %v369 = vpop.f32.mrf.mxu0
      %v370 = vadd.f32 0.0, %v369
      %371 = vdwg.mxu0
      %v372 = vmul.f32 %v253, %v253
      %vm373 = vcmask 130048
      %v374 = vsel %vm373, %v372, 0.0
      %v375 = vrot.slane %v374, 4
      %v376 = vadd.f32 %v374, %v375
      %v377 = vrot.slane %v376, 2
      %v378 = vadd.f32 %v376, %v377
      %v379 = vrot.slane %v378, 1
      %v380 = vadd.f32 %v378, %v379
      %v381 = vmul.f32 %v380, 0.17677669
      %v382 = vld [vmem:[#allocation2] sm:$0x1]
      %v383 = vsel %vm373, %v333, -inf
      %v384 = vsel %vm373, %v335, -inf
      %v385 = vsel %vm373, %v338, -inf
      %v386 = vsel %vm373, %v340, -inf
      %v387 = vsel %vm373, %v343, -inf
      %v388 = vmax.f32 %v383, %v387
      %v389 = vsel %vm373, %v345, -inf
      %v390 = vmax.f32 %v384, %v389
      %v391 = vsel %vm373, %v348, -inf
      %v392 = vmax.f32 %v385, %v391
      %v393 = vsel %vm373, %v350, -inf
      %v394 = vmax.f32 %v386, %v393
      %v395 = vsel %vm373, %v353, -inf
      %v396 = vmax.f32 %v388, %v395
      %v397 = vsel %vm373, %v355, -inf
      %v398 = vmax.f32 %v390, %v397
      %v399 = vsel %vm373, %v358, -inf
      %v400 = vmax.f32 %v392, %v399
      %v401 = vsel %vm373, %v360, -inf
      %v402 = vmax.f32 %v394, %v401
      %v403 = vsel %vm373, %v363, -inf
      %v404 = vmax.f32 %v396, %v403
      %v405 = vsel %vm373, %v365, -inf
      %v406 = vmax.f32 %v398, %v405
      %v407 = vsel %vm373, %v368, -inf
      %v408 = vmax.f32 %v400, %v407
      %v409 = vsel %vm373, %v370, -inf
      %v410 = vmax.f32 %v402, %v409
      %v411 = vmax.f32 %v404, %v406
      %v412 = vmax.f32 %v408, %v410
      %v413 = vmax.f32 %v411, %v412
      %414 = vmax.xlane.f32.xlu0 %v413
      %v415 = vpop.xlane.xlu0 %414
      %v416 = vrot.slane %v415, 4
      %v417 = vmax.f32 %v415, %v416
      %v418 = vrot.slane %v417, 2
      %v419 = vmax.f32 %v417, %v418
      %v420 = vrot.slane %v419, 1
      %v421 = vmax.f32 %v419, %v420
      %s422 = vtos %v421
      %v423 = vstv %s422
      %v424 = vmax.f32 %v382, %v423
      %v425 = vsub.f32 %v382, %v424
      %v426 = vmul.f32 %v425, 1.442695
      %v427 = vpow.pop %v426
      %v428 = vsub.f32 %v333, %v381
      %v429 = vsub.f32 %v335, %v381
      %v430 = vsub.f32 %v338, %v381
      %v431 = vsub.f32 %v340, %v381
      %v432 = vsub.f32 %v343, %v381
      %v433 = vsub.f32 %v345, %v381
      %v434 = vsub.f32 %v348, %v381
      %v435 = vsub.f32 %v350, %v381
      %v436 = vsub.f32 %v353, %v381
      %v437 = vsub.f32 %v355, %v381
      %v438 = vsub.f32 %v358, %v381
      %v439 = vsub.f32 %v360, %v381
      %v440 = vsub.f32 %v363, %v381
      %v441 = vsub.f32 %v365, %v381
      %v442 = vsub.f32 %v368, %v381
      %v443 = vsub.f32 %v370, %v381
      %v445 = vperm.slane %v424, 0
      %446 = vset.pattern.permute.xlu0 0
      %447 = vperm.xlu0 %446, %v445
      %v448 = vpop.permute.xlu0 %447
      %v450 = vsub.f32 %v428, %v448
      %v451 = vsub.f32 %v429, %v448
      %v452 = vsub.f32 %v430, %v448
      %v453 = vsub.f32 %v431, %v448
      %v454 = vsub.f32 %v432, %v448
      %v455 = vsub.f32 %v433, %v448
      %v456 = vsub.f32 %v434, %v448
      %v457 = vsub.f32 %v435, %v448
      %v458 = vsub.f32 %v436, %v448
      %v459 = vsub.f32 %v437, %v448
      %v460 = vsub.f32 %v438, %v448
      %v461 = vsub.f32 %v439, %v448
      %v462 = vsub.f32 %v440, %v448
      %v463 = vsub.f32 %v441, %v448
      %v464 = vsub.f32 %v442, %v448
      %v465 = vsub.f32 %v443, %v448
      %v466 = vpack.c.bf16 %v451, %v450
      %v467 = vpack.c.bf16 %v453, %v452
      %v468 = vpack.c.bf16 %v455, %v454
      %v469 = vpack.c.bf16 %v457, %v456
      %v470 = vpack.c.bf16 %v459, %v458
      %v471 = vpack.c.bf16 %v461, %v460
      %v472 = vpack.c.bf16 %v463, %v462
      %v473 = vpack.c.bf16 %v465, %v464
      %v474 = vunpack.c.l.bf16 %v466
      %v475 = vunpack.c.h.bf16 %v466
      %v476 = vunpack.c.l.bf16 %v467
      %v477 = vunpack.c.h.bf16 %v467
      %v478 = vunpack.c.l.bf16 %v468
      %v479 = vunpack.c.h.bf16 %v468
      %v480 = vunpack.c.l.bf16 %v469
      %v481 = vunpack.c.h.bf16 %v469
      %v482 = vunpack.c.l.bf16 %v470
      %v483 = vunpack.c.h.bf16 %v470
      %v484 = vunpack.c.l.bf16 %v471
      %v485 = vunpack.c.h.bf16 %v471
      %v486 = vunpack.c.l.bf16 %v472
      %v487 = vunpack.c.h.bf16 %v472
      %v488 = vunpack.c.l.bf16 %v473
      %v489 = vunpack.c.h.bf16 %v473
      %v490 = vmul.f32 %v474, 1.442695
      %v491 = vpow.pop %v490
      %v492 = vmul.f32 %v475, 1.442695
      %v493 = vpow.pop %v492
      %v494 = vmul.f32 %v476, 1.442695
      %v495 = vpow.pop %v494
      %v496 = vmul.f32 %v477, 1.442695
      %v497 = vpow.pop %v496
      %v498 = vmul.f32 %v478, 1.442695
      %v499 = vpow.pop %v498
      %v500 = vmul.f32 %v479, 1.442695
      %v501 = vpow.pop %v500
      %v502 = vmul.f32 %v480, 1.442695
      %v503 = vpow.pop %v502
      %v504 = vmul.f32 %v481, 1.442695
      %v505 = vpow.pop %v504
      %v506 = vmul.f32 %v482, 1.442695
      %v507 = vpow.pop %v506
      %v508 = vmul.f32 %v483, 1.442695
      %v509 = vpow.pop %v508
      %v510 = vmul.f32 %v484, 1.442695
      %v511 = vpow.pop %v510
      %v512 = vmul.f32 %v485, 1.442695
      %v513 = vpow.pop %v512
      %v514 = vmul.f32 %v486, 1.442695
      %v515 = vpow.pop %v514
      %v516 = vmul.f32 %v487, 1.442695
      %v517 = vpow.pop %v516
      %v518 = vmul.f32 %v488, 1.442695
      %v519 = vpow.pop %v518
      %v520 = vmul.f32 %v489, 1.442695
      %v521 = vpow.pop %v520
      %v522 = vpack.c.bf16 %v493, %v491
      %v523 = vpack.c.bf16 %v497, %v495
      %v524 = vpack.c.bf16 %v501, %v499
      %v525 = vpack.c.bf16 %v505, %v503
      %v526 = vpack.c.bf16 %v509, %v507
      %v527 = vpack.c.bf16 %v513, %v511
      %v528 = vpack.c.bf16 %v517, %v515
      %v529 = vpack.c.bf16 %v521, %v519
      %v530 = vld [vmem:[%s221] sm:$0xff]
      %v531 = vld [vmem:[%s221 + $0x8] sm:$0xff]
      %v533 = vperm.slane %v427, 0
      %534 = vset.pattern.permute.xlu0 0
      %535 = vperm.xlu0 %534, %v533
      %v536 = vpop.permute.xlu0 %535
      %v538 = vmul.f32 %v530, %v536
      %v539 = vmul.f32 %v531, %v536
      %v542 = vunpack.c.l.b16 %v235
      %v543 = vunpack.c.l.b16 %v236
      %v544 = vpack.c.b16 %v543, %v542
      %v546 = vsel %vm373, %v544, 0
      %v549 = vsel %vm373, %v522, 0
      %v552 = vsel %vm373, %v523, 0
      %v555 = vsel %vm373, %v524, 0
      %v558 = vsel %vm373, %v525, 0
      %v561 = vsel %vm373, %v526, 0
      %v564 = vsel %vm373, %v527, 0
      %v567 = vsel %vm373, %v528, 0
      %v570 = vsel %vm373, %v529, 0
      %572 = vmatpush.bf16.xpose.msra.mxu0 %v570
      %573 = vmatpush.bf16.xpose.msra.mxu0 %v567
      %574 = vmatpush.bf16.xpose.msra.mxu0 %v564
      %575 = vmatpush.bf16.xpose.msra.mxu0 %v561
      %576 = vmatpush.bf16.xpose.msra.mxu0 %v558
      %577 = vmatpush.bf16.xpose.msra.mxu0 %v555
      %578 = vmatpush.bf16.xpose.msra.mxu0 %v552
      %579 = vmatpush.bf16.xpose.msra.mxu0 %v549
      %580 = vmatmul.bf16.gmra.mxu0 %v546
      %v581 = vpop.f32.mrf.mxu0
      %v582 = vadd.f32 0.0, %v581
      %v583 = vpop.f32.mrf.mxu0
      %v584 = vadd.f32 0.0, %v583
      %585 = vdwg.mxu0
      %v586 = vadd.f32 %v538, %v582
      %v587 = vadd.f32 %v539, %v584
      %588 = vst [vmem:[%s221] sm:$0xff] %v586
      %589 = vst [vmem:[%s221 + $0x8] sm:$0xff] %v587
      %v590 = vld [vmem:[#allocation3] sm:$0xff]
      %v591 = vld [vmem:[#allocation3 + $0x8] sm:$0xff]
      %v592 = vunpack.c.l.bf16 %v235
      %v593 = vunpack.c.l.bf16 %v236
      %v594 = vsel %vm373, %v592, 0.0
      %595 = vadd.xlane.f32.xlu0 %v594
      %v596 = vpop.xlane.xlu0 %595
      %v597 = vsel %vm373, %v593, 0.0
      %598 = vadd.xlane.f32.xlu0 %v597
      %v599 = vpop.xlane.xlu0 %598
      %v600 = vadd.f32 %v590, %v596
      %v601 = vadd.f32 %v591, %v599
      %vm602 = vcmask 7168
      %603 = vst.msk [vmem:[#allocation3] sm:$0xff] %vm602, %v600
      %604 = vst.msk [vmem:[#allocation3 + $0x8] sm:$0xff] %vm602, %v601
      %vm605 = vcmask 0
      %606 = vst.msk [vmem:[#allocation2] sm:$0x1] %vm605, %v424
      // Predicated region
      $region37: #{favorplus_forward.2} parent=31 // pred_check
        %p607 = pneg %p223
      $region38: #{favorplus_forward.2} parent=31 // pred_check_branch
        %609 = sbr.rel (%p607) target = $region40
      $region39: #{favorplus_forward.2} parent=31 // pred_region
        %v610 = vld [vmem:[%s221] sm:$0xff]
        %v611 = vld [vmem:[%s221 + $0x8] sm:$0xff]
        %v612 = vld [vmem:[#allocation3] sm:$0xff]
        %v613 = vld [vmem:[#allocation3 + $0x8] sm:$0xff]
        %v614 = vmul.f32 %v612, 0.0001
        %v615 = vmul.f32 %v613, 0.0001
        %617 = vset.pattern.permute.xlu0 0
        %618 = vperm.xlu0 %617, %v614
        %v619 = vpop.permute.xlu0 %618
        %622 = vset.pattern.permute.xlu0 0
        %623 = vperm.xlu0 %622, %v615
        %v624 = vpop.permute.xlu0 %623
        %v626 = vadd.f32 %v610, %v619
        %v627 = vadd.f32 %v611, %v624
        %628 = vst [vmem:[%s221] sm:$0xff] %v626
        %629 = vst [vmem:[%s221 + $0x8] sm:$0xff] %v627
      $region40: #{favorplus_forward.2} parent=31 // pred_fallthru
        _
      %p630 = scmp.lt.s32.totalorder %s18, 7
      %s631 = scalar_select %p630, %s18, 7
      %s632 = smul.addr %s631, 2
      %s633 = smul.addr %s632, 8
      %s634 = scalar_lea.vmem %s3, %s633
      // Predicated region
      $region41: #{favorplus_forward.2} parent=31 // pred_check
        %p635 = pneg %p121
      $region42: #{favorplus_forward.2} parent=31 // pred_check_branch
        %637 = sbr.rel (%p635) target = $region44
      $region43: #{favorplus_forward.2} parent=31 // pred_region
        _
      $region44: #{favorplus_forward.2} parent=31 // pred_fallthru
        _
    $region32: #{favorplus_forward.2} parent=5 // pred_fallthru
      _
    %p638 = scmp.le.s32.totalorder 2, %s9
    // Predicated region
    $region45: #{favorplus_forward.2} parent=5 // pred_check
      %p639 = pneg %p638
    $region46: #{favorplus_forward.2} parent=5 // pred_check_branch
      %641 = sbr.rel (%p639) target = $region48
    $region47: #{favorplus_forward.2} parent=5 // pred_region
      %s642 = ssub.s32 %s9, 2
      // Predicated region
      $region49: #{favorplus_forward.2} parent=47 // pred_check
        %p643 = pneg %p127
      $region50: #{favorplus_forward.2} parent=47 // pred_check_branch
        %645 = sbr.rel (%p643) target = $region52
      $region51: #{favorplus_forward.2} parent=47 // pred_region
        %p646 = scmp.lt.s32.totalorder %s20, 7
        %s647 = scalar_select %p646, %s20, 7
        %s648 = smul.addr %s647, 2
        %s649 = smul.addr %s648, 8
        %s650 = scalar_lea.vmem %s3, %s649
      $region52: #{favorplus_forward.2} parent=47 // pred_fallthru
        _
    $region48: #{favorplus_forward.2} parent=5 // pred_fallthru
      _
  $region6: #{favorplus_forward.2} parent=0 // loop_footer
    %s13 = sadd.s32 1, %s9
  $region7: #{favorplus_forward.2} parent=0 // loop_footer_branch
    %8 = sbr.rel target = $region3
  $region8: #{favorplus_forward.2} parent=0 // loop_exit
    _

// kernel: favorplus_forward.3
$region0: #{favorplus_forward.3}
  #allocation0 [shape = 'u32[]', space=smem, size = 0x4, offset = 0x4, fixed_abs, tag = 'smem constant byte address 0x4 - core index']
  #allocation1 [shape = 'u32[72,128]{1,0:T(1,128)}', space=vmem, size = 0x9000, scoped, tag = 'internal scratch']
  %s0 = inlined_call_operand.vmem [shape: bf16[8,8,16], index: 0, kind: input, shape index: {}]
  %s1 = inlined_call_operand.vmem [shape: bf16[128,8], index: 1, kind: input, shape index: {}]
  %s2 = inlined_call_operand.vmem [shape: f32[8,16,128], index: 2, kind: input, shape index: {}]
  %s3 = inlined_call_operand.vmem [shape: bf16[8,8,16], index: 3, kind: output, shape index: {}]
  %s4 = sld [smem:[#allocation0]]
  $region45: #{favorplus_forward.3} parent=0
    _
  %s6 = ssub.s32 1, %s4
  %s7 = scalar_select 0, %s6, %s4
  loop: start=0, step=1, limit=10
  $region2: #{favorplus_forward.3} parent=0 // loop_pre_header
    _
  $region3: #{favorplus_forward.3} parent=0 // loop_header
    %s9 = sphi 0, %s13
    %p10 = scmp.ge.s32.totalorder %s9, 10
    %s16 = sphi 0, %s28
    %s17 = sphi 0, %s24
    %s18 = sphi 0, %s16
    %s19 = sphi 0, %s17
    %s20 = sphi 0, %s18
    %s21 = sphi 0, %s19
    %s33 = sphi 0, %s35
    %s36 = sphi 0, %s33
    %s37 = sphi 0, %s36
    %s53 = sphi 0, %s37
    %s57 = sphi 0, %s57
    %s59 = sphi 0, %s57
    %s60 = sphi 0, %s59
    %s74 = sphi 0, %s60
    %s80 = sphi 0, %s82
    %s83 = sphi 0, %s80
    %s84 = sphi 0, %s83
    %s100 = sphi 0, %s84
    %s108 = sphi 0, %s110
    %s111 = sphi 0, %s108
    %s112 = sphi 0, %s111
    %s128 = sphi 0, %s112
  $region4: #{favorplus_forward.3} parent=0 // loop_header_branch
    %12 = sbr.rel (%p10) target = $region8
  $region5: #{favorplus_forward.3} parent=0 // loop_body
    %s14 = ssub.s32 %s9, 1
    %s15 = ssub.s32 %s9, 2
    %s22 = sadd.s32 1, %s17
    %p23 = scmp.ge.s32.totalorder %s22, 1
    %s24 = scalar_select %p23, 0, %s22
    %s25 = sadd.s32 1, %s16
    %s26 = scalar_select %p23, %s25, %s16
    %p27 = scmp.ge.s32.totalorder %s26, 8
    %s28 = scalar_select %p27, 0, %s26
    %s29 = ssub.s32 %s16, %s28
    %s30 = ssub.s32 %s17, %s24
    %s31 = sor.u32 %s29, %s30
    %p32 = scmp.eq.s32.totalorder %s31, 0
    %s34 = sadd.s32 %s33, 1
    %s35 = scalar_select %p32, %s33, %s34
    %p38 = pneg %p32
    %p39 = scmp.eq.s32.totalorder %s9, 7
    %p40 = por %p38, %p39
    %p41 = scmp.ne.s32.totalorder %s33, %s36
    %p42 = scmp.eq.s32.totalorder %s9, 0
    %p43 = por %p41, %p42
    %p44 = scmp.ne.s32.totalorder %s33, %s36
    %p45 = scmp.eq.s32.totalorder %s14, 7
    %p46 = por %p44, %p45
    %p47 = scmp.ne.s32.totalorder %s36, %s37
    %p48 = scmp.eq.s32.totalorder %s14, 0
    %p49 = por %p47, %p48
    %p50 = scmp.ne.s32.totalorder %s36, %s37
    %p51 = scmp.eq.s32.totalorder %s15, 7
    %p52 = por %p50, %p51
    %p54 = scmp.ne.s32.totalorder %s37, %s53
    %p55 = scmp.eq.s32.totalorder %s15, 0
    %p56 = por %p54, %p55
    %s58 = sadd.s32 %s57, 1
    %p61 = scmp.eq.s32.totalorder %s9, 7
    %p62 = scmp.ne.s32.totalorder %s57, %s59
    %p63 = scmp.eq.s32.totalorder %s9, 0
    %p64 = por %p62, %p63
    %p65 = scmp.ne.s32.totalorder %s57, %s59
    %p66 = scmp.eq.s32.totalorder %s14, 7
    %p67 = por %p65, %p66
    %p68 = scmp.ne.s32.totalorder %s59, %s60
    %p69 = scmp.eq.s32.totalorder %s14, 0
    %p70 = por %p68, %p69
    %p71 = scmp.ne.s32.totalorder %s59, %s60
    %p72 = scmp.eq.s32.totalorder %s15, 7
    %p73 = por %p71, %p72
    %p75 = scmp.ne.s32.totalorder %s60, %s74
    %p76 = scmp.eq.s32.totalorder %s15, 0
    %p77 = por %p75, %p76
    %s78 = ssub.s32 %s16, %s28
    %p79 = scmp.eq.s32.totalorder %s78, 0
    %s81 = sadd.s32 %s80, 1
    %s82 = scalar_select %p79, %s80, %s81
    %p85 = pneg %p79
    %p86 = scmp.eq.s32.totalorder %s9, 7
    %p87 = por %p85, %p86
    %p88 = scmp.ne.s32.totalorder %s80, %s83
    %p89 = scmp.eq.s32.totalorder %s9, 0
    %p90 = por %p88, %p89
    %p91 = scmp.ne.s32.totalorder %s80, %s83
    %p92 = scmp.eq.s32.totalorder %s14, 7
    %p93 = por %p91, %p92
    %p94 = scmp.ne.s32.totalorder %s83, %s84
    %p95 = scmp.eq.s32.totalorder %s14, 0
    %p96 = por %p94, %p95
    %p97 = scmp.ne.s32.totalorder %s83, %s84
    %p98 = scmp.eq.s32.totalorder %s15, 7
    %p99 = por %p97, %p98
    %p101 = scmp.ne.s32.totalorder %s84, %s100
    %p102 = scmp.eq.s32.totalorder %s15, 0
    %p103 = por %p101, %p102
    %s104 = ssub.s32 %s16, %s28
    %s105 = ssub.s32 %s17, %s24
    %s106 = sor.u32 %s104, %s105
    %p107 = scmp.eq.s32.totalorder %s106, 0
    %s109 = sadd.s32 %s108, 1
    %s110 = scalar_select %p107, %s108, %s109
    %p113 = pneg %p107
    %p114 = scmp.eq.s32.totalorder %s9, 7
    %p115 = por %p113, %p114
    %p116 = scmp.ne.s32.totalorder %s108, %s111
    %p117 = scmp.eq.s32.totalorder %s9, 0
    %p118 = por %p116, %p117
    %p119 = scmp.ne.s32.totalorder %s108, %s111
    %p120 = scmp.eq.s32.totalorder %s14, 7
    %p121 = por %p119, %p120
    %p122 = scmp.ne.s32.totalorder %s111, %s112
    %p123 = scmp.eq.s32.totalorder %s14, 0
    %p124 = por %p122, %p123
    %p125 = scmp.ne.s32.totalorder %s111, %s112
    %p126 = scmp.eq.s32.totalorder %s15, 7
    %p127 = por %p125, %p126
    %p129 = scmp.ne.s32.totalorder %s112, %s128
    %p130 = scmp.eq.s32.totalorder %s15, 0
    %p131 = por %p129, %p130
    %p132 = scmp.le.s32.totalorder 1, %s9
    %p133 = scmp.lt.s32.totalorder %s9, 9
    %p134 = pnand %p132, %p133
    %p135 = pneg %p134
    // Predicated region
    $region9: #{favorplus_forward.3} parent=5 // pred_check
      _
    $region10: #{favorplus_forward.3} parent=5 // pred_check_branch
      %137 = sbr.rel (%p134) target = $region12
    $region11: #{favorplus_forward.3} parent=5 // pred_region
      %s138 = ssub.s32 %s9, 1
      // Predicated region
      $region13: #{favorplus_forward.3} parent=11 // pred_check
        %p139 = pneg %p70
      $region14: #{favorplus_forward.3} parent=11 // pred_check_branch
        %141 = sbr.rel (%p139) target = $region16
      $region15: #{favorplus_forward.3} parent=11 // pred_region
        _
      $region16: #{favorplus_forward.3} parent=11 // pred_fallthru
        _
    $region12: #{favorplus_forward.3} parent=5 // pred_fallthru
      _
    %p142 = scmp.lt.s32.totalorder %s9, 8
    // Predicated region
    $region17: #{favorplus_forward.3} parent=5 // pred_check
      %p143 = pneg %p142
    $region18: #{favorplus_forward.3} parent=5 // pred_check_branch
      %145 = sbr.rel (%p143) target = $region20
    $region19: #{favorplus_forward.3} parent=5 // pred_region
      // Predicated region
      $region21: #{favorplus_forward.3} parent=19 // pred_check
        %p146 = pneg %p43
      $region22: #{favorplus_forward.3} parent=19 // pred_check_branch
        %148 = sbr.rel (%p146) target = $region24
      $region23: #{favorplus_forward.3} parent=19 // pred_region
        %p149 = scmp.lt.s32.totalorder %s16, 7
        %s150 = scalar_select %p149, %s16, 7
        %p151 = scmp.lt.s32.totalorder %s17, 0
        %s152 = scalar_select %p151, %s17, 0
        %s153 = sadd.s32 %s152, %s150
        %s154 = smul.addr %s153, 4
        %s155 = scalar_lea.vmem %s0, %s154
      $region24: #{favorplus_forward.3} parent=19 // pred_fallthru
        _
      // Predicated region
      $region25: #{favorplus_forward.3} parent=19 // pred_check
        %p156 = pneg %p90
      $region26: #{favorplus_forward.3} parent=19 // pred_check_branch
        %158 = sbr.rel (%p156) target = $region28
      $region27: #{favorplus_forward.3} parent=19 // pred_region
        %p159 = scmp.lt.s32.totalorder %s16, 7
        %s160 = scalar_select %p159, %s16, 7
        %s161 = smul.addr %s160, 2
        %s162 = smul.addr %s161, 8
        %s163 = scalar_lea.vmem %s2, %s162
      $region28: #{favorplus_forward.3} parent=19 // pred_fallthru
        _
    $region20: #{favorplus_forward.3} parent=5 // pred_fallthru
      _
    %p164 = scmp.le.s32.totalorder 1, %s9
    %p165 = scmp.lt.s32.totalorder %s9, 9
    %p166 = pnand %p164, %p165
    %p167 = pneg %p166
    // Predicated region
    $region29: #{favorplus_forward.3} parent=5 // pred_check
      _
    $region30: #{favorplus_forward.3} parent=5 // pred_check_branch
      %169 = sbr.rel (%p166) target = $region32
    $region31: #{favorplus_forward.3} parent=5 // pred_region
      %s170 = ssub.s32 %s9, 1
      %p171 = scmp.lt.s32.totalorder %s18, 7
      %s172 = scalar_select %p171, %s18, 7
      %p173 = scmp.lt.s32.totalorder %s19, 0
      %s174 = scalar_select %p173, %s19, 0
      %s175 = sadd.s32 %s174, %s172
      %s176 = smul.addr %s175, 4
      %s177 = scalar_lea.vmem %s0, %s176
      %p178 = pneg %p49
      %p179 = pneg %p46
      %p180 = pneg %p70
      %p181 = pneg %p67
      %p182 = scmp.lt.s32.totalorder %s18, 7
      %s183 = scalar_select %p182, %s18, 7
      %s184 = smul.addr %s183, 2
      %s185 = smul.addr %s184, 8
      %s186 = scalar_lea.vmem %s2, %s185
      %p187 = pneg %p96
      %p188 = pneg %p93
      %p189 = pneg %p124
      %p190 = pneg %p121
      %p191 = scmp.lt.s32.totalorder %s18, 7
      %s192 = scalar_select %p191, %s18, 7
      %p193 = scmp.lt.s32.totalorder %s19, 0
      %s194 = scalar_select %p193, %s19, 0
      %s195 = sadd.s32 %s194, %s192
      %s196 = smul.addr %s195, 4
      %s197 = scalar_lea.vmem %s3, %s196
      %p198 = scmp.lt.s32.totalorder %s18, 7
      %s199 = scalar_select %p198, %s18, 7
      %p200 = scmp.lt.s32.totalorder %s19, 0
      %s201 = scalar_select %p200, %s19, 0
      %s202 = sadd.s32 %s201, %s199
      %s203 = smul.addr %s202, 4
      %s204 = scalar_lea.vmem %s0, %s203
      %p205 = scmp.lt.s32.totalorder %s18, 7
      %s206 = scalar_select %p205, %s18, 7
      %s207 = smul.addr %s206, 2
      %s208 = smul.addr %s207, 8
      %s209 = scalar_lea.vmem %s2, %s208
      %p210 = scmp.lt.s32.totalorder %s18, 7
      %s211 = scalar_select %p210, %s18, 7
      %p212 = scmp.lt.s32.totalorder %s19, 0
      %s213 = scalar_select %p212, %s19, 0
      %s214 = sadd.s32 %s213, %s211
      %s215 = smul.addr %s214, 4
      %s216 = scalar_lea.vmem %s3, %s215
      %v218 = vld [vmem:[%s204] sm:$0xf]
      %v219 = vld [vmem:[%s1] sm:$0xf]
      %v220 = vld [vmem:[%s1 + $0x4] sm:$0xf]
      %v221 = vld [vmem:[%s1 + $0x8] sm:$0xf]
      %v222 = vld [vmem:[%s1 + $0xc] sm:$0xf]
      %v223 = vld [vmem:[%s1 + $0x10] sm:$0xf]
      %v224 = vld [vmem:[%s1 + $0x14] sm:$0xf]
      %v225 = vld [vmem:[%s1 + $0x18] sm:$0xf]
      %v226 = vld [vmem:[%s1 + $0x1c] sm:$0xf]
      %v227 = vld [vmem:[%s1 + $0x20] sm:$0xf]
      %v228 = vld [vmem:[%s1 + $0x24] sm:$0xf]
      %v229 = vld [vmem:[%s1 + $0x28] sm:$0xf]
      %v230 = vld [vmem:[%s1 + $0x2c] sm:$0xf]
      %v231 = vld [vmem:[%s1 + $0x30] sm:$0xf]
      %v232 = vld [vmem:[%s1 + $0x34] sm:$0xf]
      %v233 = vld [vmem:[%s1 + $0x38] sm:$0xf]
      %v234 = vld [vmem:[%s1 + $0x3c] sm:$0xf]
      %v235 = vunpack.c.l.bf16 %v218
      %v252 = vunpack.c.l.b16 %v219
      %v253 = vunpack.c.l.b16 %v220
      %v254 = vunpack.c.l.b16 %v221
      %v255 = vunpack.c.l.b16 %v222
      %v256 = vunpack.c.l.b16 %v223
      %v257 = vunpack.c.l.b16 %v224
      %v258 = vunpack.c.l.b16 %v225
      %v259 = vunpack.c.l.b16 %v226
      %v260 = vunpack.c.l.b16 %v227
      %v261 = vunpack.c.l.b16 %v228
      %v262 = vunpack.c.l.b16 %v229
      %v263 = vunpack.c.l.b16 %v230
      %v264 = vunpack.c.l.b16 %v231
      %v265 = vunpack.c.l.b16 %v232
      %v266 = vunpack.c.l.b16 %v233
      %v267 = vunpack.c.l.b16 %v234
      %v268 = vpack.c.b16 %v253, %v252
      %v269 = vpack.c.b16 %v255, %v254
      %v270 = vpack.c.b16 %v257, %v256
      %v271 = vpack.c.b16 %v259, %v258
      %v272 = vpack.c.b16 %v261, %v260
      %v273 = vpack.c.b16 %v263, %v262
      %v274 = vpack.c.b16 %v265, %v264
      %v275 = vpack.c.b16 %v267, %v266
      %vm276 = vcmask 64512
      %v278 = vsel %vm276, %v268, 0
      %v281 = vsel %vm276, %v269, 0
      %v284 = vsel %vm276, %v270, 0
      %v287 = vsel %vm276, %v271, 0
      %v290 = vsel %vm276, %v272, 0
      %v293 = vsel %vm276, %v273, 0
      %v296 = vsel %vm276, %v274, 0
      %v299 = vsel %vm276, %v275, 0
      %vm301 = vcmask 1043456
      %v303 = vsel %vm301, %v218, 0
      %305 = vmatpush.bf16.msra.mxu0 0
      %306 = vmatpush.bf16.msra.mxu0 0
      %307 = vmatpush.bf16.msra.mxu0 0
      %308 = vmatpush.bf16.msra.mxu0 0
      %309 = vmatpush.bf16.msra.mxu0 0
      %310 = vmatpush.bf16.msra.mxu0 0
      %311 = vmatpush.bf16.msra.mxu0 0
      %312 = vmatpush.bf16.msra.mxu0 %v303
      %313 = vmatmul.bf16.gmra.mxu0 %v278
      %v314 = vpop.f32.mrf.mxu0
      %v315 = vadd.f32 0.0, %v314
      %v316 = vpop.f32.mrf.mxu0
      %v317 = vadd.f32 0.0, %v316
      %318 = vmatmul.bf16.gmra.mxu0 %v281
      %v319 = vpop.f32.mrf.mxu0
      %v320 = vadd.f32 0.0, %v319
      %v321 = vpop.f32.mrf.mxu0
      %v322 = vadd.f32 0.0, %v321
      %323 = vmatmul.bf16.gmra.mxu0 %v284
      %v324 = vpop.f32.mrf.mxu0
      %v325 = vadd.f32 0.0, %v324
      %v326 = vpop.f32.mrf.mxu0
      %v327 = vadd.f32 0.0, %v326
      %328 = vmatmul.bf16.gmra.mxu0 %v287
      %v329 = vpop.f32.mrf.mxu0
      %v330 = vadd.f32 0.0, %v329
      %v331 = vpop.f32.mrf.mxu0
      %v332 = vadd.f32 0.0, %v331
      %333 = vmatmul.bf16.gmra.mxu0 %v290
      %v334 = vpop.f32.mrf.mxu0
      %v335 = vadd.f32 0.0, %v334
      %v336 = vpop.f32.mrf.mxu0
      %v337 = vadd.f32 0.0, %v336
      %338 = vmatmul.bf16.gmra.mxu0 %v293
      %v339 = vpop.f32.mrf.mxu0
      %v340 = vadd.f32 0.0, %v339
      %v341 = vpop.f32.mrf.mxu0
      %v342 = vadd.f32 0.0, %v341
      %343 = vmatmul.bf16.gmra.mxu0 %v296
      %v344 = vpop.f32.mrf.mxu0
      %v345 = vadd.f32 0.0, %v344
      %v346 = vpop.f32.mrf.mxu0
      %v347 = vadd.f32 0.0, %v346
      %348 = vmatmul.bf16.gmra.mxu0 %v299
      %v349 = vpop.f32.mrf.mxu0
      %v350 = vadd.f32 0.0, %v349
      %v351 = vpop.f32.mrf.mxu0
      %v352 = vadd.f32 0.0, %v351
      %353 = vdwg.mxu0
      %v354 = vmul.f32 %v235, %v235
      %vm355 = vcmask 130048
      %v356 = vsel %vm355, %v354, 0.0
      %v357 = vrot.slane %v356, 4
      %v358 = vadd.f32 %v356, %v357
      %v359 = vrot.slane %v358, 2
      %v360 = vadd.f32 %v358, %v359
      %v361 = vrot.slane %v360, 1
      %v362 = vadd.f32 %v360, %v361
      %v363 = vmul.f32 %v362, 0.17677669
      %v364 = vsub.f32 %v315, %v363
      %v365 = vsub.f32 %v317, %v363
      %v366 = vsub.f32 %v320, %v363
      %v367 = vsub.f32 %v322, %v363
      %v368 = vsub.f32 %v325, %v363
      %v369 = vsub.f32 %v327, %v363
      %v370 = vsub.f32 %v330, %v363
      %v371 = vsub.f32 %v332, %v363
      %v372 = vsub.f32 %v335, %v363
      %v373 = vsub.f32 %v337, %v363
      %v374 = vsub.f32 %v340, %v363
      %v375 = vsub.f32 %v342, %v363
      %v376 = vsub.f32 %v345, %v363
      %v377 = vsub.f32 %v347, %v363
      %v378 = vsub.f32 %v350, %v363
      %v379 = vsub.f32 %v352, %v363
      %v380 = vsel %vm355, %v315, -inf
      %v381 = vsel %vm355, %v317, -inf
      %v382 = vsel %vm355, %v320, -inf
      %v383 = vsel %vm355, %v322, -inf
      %v384 = vsel %vm355, %v325, -inf
      %v385 = vmax.f32 %v380, %v384
      %v386 = vsel %vm355, %v327, -inf
      %v387 = vmax.f32 %v381, %v386
      %v388 = vsel %vm355, %v330, -inf
      %v389 = vmax.f32 %v382, %v388
      %v390 = vsel %vm355, %v332, -inf
      %v391 = vmax.f32 %v383, %v390
      %v392 = vsel %vm355, %v335, -inf
      %v393 = vmax.f32 %v385, %v392
      %v394 = vsel %vm355, %v337, -inf
      %v395 = vmax.f32 %v387, %v394
      %v396 = vsel %vm355, %v340, -inf
      %v397 = vmax.f32 %v389, %v396
      %v398 = vsel %vm355, %v342, -inf
      %v399 = vmax.f32 %v391, %v398
      %v400 = vsel %vm355, %v345, -inf
      %v401 = vmax.f32 %v393, %v400
      %v402 = vsel %vm355, %v347, -inf
      %v403 = vmax.f32 %v395, %v402
      %v404 = vsel %vm355, %v350, -inf
      %v405 = vmax.f32 %v397, %v404
      %v406 = vsel %vm355, %v352, -inf
      %v407 = vmax.f32 %v399, %v406
      %v408 = vmax.f32 %v401, %v403
      %v409 = vmax.f32 %v405, %v407
      %v410 = vmax.f32 %v408, %v409
      %v411 = vrot.slane %v410, 4
      %v412 = vmax.f32 %v410, %v411
      %v413 = vrot.slane %v412, 2
      %v414 = vmax.f32 %v412, %v413
      %v415 = vrot.slane %v414, 1
      %v416 = vmax.f32 %v414, %v415
      %v417 = vsub.f32 %v364, %v416
      %v418 = vsub.f32 %v365, %v416
      %v419 = vsub.f32 %v366, %v416
      %v420 = vsub.f32 %v367, %v416
      %v421 = vsub.f32 %v368, %v416
      %v422 = vsub.f32 %v369, %v416
      %v423 = vsub.f32 %v370, %v416
      %v424 = vsub.f32 %v371, %v416
      %v425 = vsub.f32 %v372, %v416
      %v426 = vsub.f32 %v373, %v416
      %v427 = vsub.f32 %v374, %v416
      %v428 = vsub.f32 %v375, %v416
      %v429 = vsub.f32 %v376, %v416
      %v430 = vsub.f32 %v377, %v416
      %v431 = vsub.f32 %v378, %v416
      %v432 = vsub.f32 %v379, %v416
      %v433 = vpack.c.bf16 %v417, %v417
      %v434 = vpack.c.bf16 %v418, %v418
      %v435 = vpack.c.bf16 %v419, %v419
      %v436 = vpack.c.bf16 %v420, %v420
      %v437 = vpack.c.bf16 %v421, %v421
      %v438 = vpack.c.bf16 %v422, %v422
      %v439 = vpack.c.bf16 %v423, %v423
      %v440 = vpack.c.bf16 %v424, %v424
      %v441 = vpack.c.bf16 %v425, %v425
      %v442 = vpack.c.bf16 %v426, %v426
      %v443 = vpack.c.bf16 %v427, %v427
      %v444 = vpack.c.bf16 %v428, %v428
      %v445 = vpack.c.bf16 %v429, %v429
      %v446 = vpack.c.bf16 %v430, %v430
      %v447 = vpack.c.bf16 %v431, %v431
      %v448 = vpack.c.bf16 %v432, %v432
      %v449 = vunpack.c.l.bf16 %v433
      %v450 = vunpack.c.l.bf16 %v434
      %v451 = vunpack.c.l.bf16 %v435
      %v452 = vunpack.c.l.bf16 %v436
      %v453 = vunpack.c.l.bf16 %v437
      %v454 = vunpack.c.l.bf16 %v438
      %v455 = vunpack.c.l.bf16 %v439
      %v456 = vunpack.c.l.bf16 %v440
      %v457 = vunpack.c.l.bf16 %v441
      %v458 = vunpack.c.l.bf16 %v442
      %v459 = vunpack.c.l.bf16 %v443
      %v460 = vunpack.c.l.bf16 %v444
      %v461 = vunpack.c.l.bf16 %v445
      %v462 = vunpack.c.l.bf16 %v446
      %v463 = vunpack.c.l.bf16 %v447
      %v464 = vunpack.c.l.bf16 %v448
      %v465 = vmul.f32 %v449, 1.442695
      %v466 = vpow.pop %v465
      %v467 = vmul.f32 %v450, 1.442695
      %v468 = vpow.pop %v467
      %v469 = vmul.f32 %v451, 1.442695
      %v470 = vpow.pop %v469
      %v471 = vmul.f32 %v452, 1.442695
      %v472 = vpow.pop %v471
      %v473 = vmul.f32 %v453, 1.442695
      %v474 = vpow.pop %v473
      %v475 = vmul.f32 %v454, 1.442695
      %v476 = vpow.pop %v475
      %v477 = vmul.f32 %v455, 1.442695
      %v478 = vpow.pop %v477
      %v479 = vmul.f32 %v456, 1.442695
      %v480 = vpow.pop %v479
      %v481 = vmul.f32 %v457, 1.442695
      %v482 = vpow.pop %v481
      %v483 = vmul.f32 %v458, 1.442695
      %v484 = vpow.pop %v483
      %v485 = vmul.f32 %v459, 1.442695
      %v486 = vpow.pop %v485
      %v487 = vmul.f32 %v460, 1.442695
      %v488 = vpow.pop %v487
      %v489 = vmul.f32 %v461, 1.442695
      %v490 = vpow.pop %v489
      %v491 = vmul.f32 %v462, 1.442695
      %v492 = vpow.pop %v491
      %v493 = vmul.f32 %v463, 1.442695
      %v494 = vpow.pop %v493
      %v495 = vmul.f32 %v464, 1.442695
      %v496 = vpow.pop %v495
      %v497 = vpack.c.bf16 %v466, %v466
      %v498 = vpack.c.bf16 %v468, %v468
      %v499 = vpack.c.bf16 %v470, %v470
      %v500 = vpack.c.bf16 %v472, %v472
      %v501 = vpack.c.bf16 %v474, %v474
      %v502 = vpack.c.bf16 %v476, %v476
      %v503 = vpack.c.bf16 %v478, %v478
      %v504 = vpack.c.bf16 %v480, %v480
      %v505 = vpack.c.bf16 %v482, %v482
      %v506 = vpack.c.bf16 %v484, %v484
      %v507 = vpack.c.bf16 %v486, %v486
      %v508 = vpack.c.bf16 %v488, %v488
      %v509 = vpack.c.bf16 %v490, %v490
      %v510 = vpack.c.bf16 %v492, %v492
      %v511 = vpack.c.bf16 %v494, %v494
      %v512 = vpack.c.bf16 %v496, %v496
      %v513 = vunpack.c.l.bf16 %v497
      %v514 = vunpack.c.l.bf16 %v498
      %v515 = vunpack.c.l.bf16 %v499
      %v516 = vunpack.c.l.bf16 %v500
      %v517 = vunpack.c.l.bf16 %v501
      %v518 = vunpack.c.l.bf16 %v502
      %v519 = vunpack.c.l.bf16 %v503
      %v520 = vunpack.c.l.bf16 %v504
      %v521 = vunpack.c.l.bf16 %v505
      %v522 = vunpack.c.l.bf16 %v506
      %v523 = vunpack.c.l.bf16 %v507
      %v524 = vunpack.c.l.bf16 %v508
      %v525 = vunpack.c.l.bf16 %v509
      %v526 = vunpack.c.l.bf16 %v510
      %v527 = vunpack.c.l.bf16 %v511
      %v528 = vunpack.c.l.bf16 %v512
      %v529 = vadd.f32 %v513, 0.0001001358
      %v530 = vadd.f32 %v514, 0.0001001358
      %v531 = vadd.f32 %v515, 0.0001001358
      %v532 = vadd.f32 %v516, 0.0001001358
      %v533 = vadd.f32 %v517, 0.0001001358
      %v534 = vadd.f32 %v518, 0.0001001358
      %v535 = vadd.f32 %v519, 0.0001001358
      %v536 = vadd.f32 %v520, 0.0001001358
      %v537 = vadd.f32 %v521, 0.0001001358
      %v538 = vadd.f32 %v522, 0.0001001358
      %v539 = vadd.f32 %v523, 0.0001001358
      %v540 = vadd.f32 %v524, 0.0001001358
      %v541 = vadd.f32 %v525, 0.0001001358
      %v542 = vadd.f32 %v526, 0.0001001358
      %v543 = vadd.f32 %v527, 0.0001001358
      %v544 = vadd.f32 %v528, 0.0001001358
      %v545 = vpack.c.bf16 %v530, %v529
      %v546 = vpack.c.bf16 %v532, %v531
      %v547 = vpack.c.bf16 %v534, %v533
      %v548 = vpack.c.bf16 %v536, %v535
      %v549 = vpack.c.bf16 %v538, %v537
      %v550 = vpack.c.bf16 %v540, %v539
      %v551 = vpack.c.bf16 %v542, %v541
      %v552 = vpack.c.bf16 %v544, %v543
      %v553 = vld [vmem:[%s209] sm:$0xff]
      %v554 = vld [vmem:[%s209 + $0x8] sm:$0xff]
      %v555 = vpack.c.bf16 %v554, %v553
      %556 = vmatpush.bf16.msra.mxu0 %v552
      %557 = vmatpush.bf16.msra.mxu0 %v551
      %558 = vmatpush.bf16.msra.mxu0 %v550
      %559 = vmatpush.bf16.msra.mxu0 %v549
      %560 = vmatpush.bf16.msra.mxu0 %v548
      %561 = vmatpush.bf16.msra.mxu0 %v547
      %562 = vmatpush.bf16.msra.mxu0 %v546
      %563 = vmatpush.bf16.msra.mxu0 %v545
      %564 = vmatmul.bf16.gmra.mxu0 %v555
      %v565 = vpop.f32.mrf.mxu0
      %v566 = vadd.f32 0.0, %v565
      %v567 = vpop.f32.mrf.mxu0
      %v568 = vadd.f32 0.0, %v567
      %569 = vdwg.mxu0
      %v570 = vrcp.pop %v568
      %v571 = vperm.slane %v570, 0
      %v572 = vmul.f32 %v566, %v571
      %v573 = vpack.c.bf16 %v572, %v572
      %vm574 = vcmask 125952
      %575 = vst.msk [vmem:[%s216] sm:$0xf] %vm574, %v573
      %p576 = scmp.lt.s32.totalorder %s18, 7
      %s577 = scalar_select %p576, %s18, 7
      %p578 = scmp.lt.s32.totalorder %s19, 0
      %s579 = scalar_select %p578, %s19, 0
      %s580 = sadd.s32 %s579, %s577
      %s581 = smul.addr %s580, 4
      %s582 = scalar_lea.vmem %s3, %s581
      // Predicated region
      $region33: #{favorplus_forward.3} parent=31 // pred_check
        %p583 = pneg %p121
      $region34: #{favorplus_forward.3} parent=31 // pred_check_branch
        %585 = sbr.rel (%p583) target = $region36
      $region35: #{favorplus_forward.3} parent=31 // pred_region
        _
      $region36: #{favorplus_forward.3} parent=31 // pred_fallthru
        _
    $region32: #{favorplus_forward.3} parent=5 // pred_fallthru
      _
    %p586 = scmp.le.s32.totalorder 2, %s9
    // Predicated region
    $region37: #{favorplus_forward.3} parent=5 // pred_check
      %p587 = pneg %p586
    $region38: #{favorplus_forward.3} parent=5 // pred_check_branch
      %589 = sbr.rel (%p587) target = $region40
    $region39: #{favorplus_forward.3} parent=5 // pred_region
      %s590 = ssub.s32 %s9, 2
      // Predicated region
      $region41: #{favorplus_forward.3} parent=39 // pred_check
        %p591 = pneg %p127
      $region42: #{favorplus_forward.3} parent=39 // pred_check_branch
        %593 = sbr.rel (%p591) target = $region44
      $region43: #{favorplus_forward.3} parent=39 // pred_region
        %p594 = scmp.lt.s32.totalorder %s20, 7
        %s595 = scalar_select %p594, %s20, 7
        %p596 = scmp.lt.s32.totalorder %s21, 0
        %s597 = scalar_select %p596, %s21, 0
        %s598 = sadd.s32 %s597, %s595
        %s599 = smul.addr %s598, 4
        %s600 = scalar_lea.vmem %s3, %s599
      $region44: #{favorplus_forward.3} parent=39 // pred_fallthru
        _
    $region40: #{favorplus_forward.3} parent=5 // pred_fallthru
      _
  $region6: #{favorplus_forward.3} parent=0 // loop_footer
    %s13 = sadd.s32 1, %s9
  $region7: #{favorplus_forward.3} parent=0 // loop_footer_branch
    %8 = sbr.rel target = $region3
  $region8: #{favorplus_forward.3} parent=0 // loop_exit
    _

</llo_original>
